<compile_context>
chip_gen: v6e
topology: v6e:2x2x1
jax: 0.10.0
libtpu: 0.0.40
codegen_flags: <defaults>
</compile_context>

<pallas_src>
import functools

import jax
import jax.numpy as jnp
from jax.experimental import pallas as pl
from jax.experimental.pallas import tpu as pltpu


def _round_up(x, m):
    return (x + m - 1) // m * m


def _device_kind():
    try:
        return jax.devices()[0].device_kind.lower()
    except Exception:
        return ""


def _default_epilogue_dtype():
    """bf16 epilogue on chips with a bf16 VPU (v6e/v7x); f32 otherwise."""
    kind = _device_kind()
    if any(t in kind for t in ("v6", "v7", "tpu7")):
        return jnp.bfloat16
    return jnp.float32


def _min_parallel_steps():
    """v7x has 2 TensorCores per chip; keep >=2 'parallel' grid steps there."""
    kind = _device_kind()
    return 2 if any(t in kind for t in ("v7", "tpu7")) else 1


# --------------------------------------------------------------------------
# Kernel
# --------------------------------------------------------------------------
def actor_kernel(x_ref, w1_ref, b1_ref, w2_ref, b2_ref, w3_ref, b3_ref,
                 wh_ref, bh_ref, out_ref, *, action_num, compute_dtype,
                 epi_dtype):
    x = x_ref[...]                                   # already compute_dtype (bf16)

    # fc1 + ReLU  (f32 MXU accumulation; epilogue in epi_dtype)
    h = jnp.dot(x, w1_ref[...], preferred_element_type=jnp.float32)
    h = jnp.maximum(h.astype(epi_dtype) + b1_ref[...], 0.0).astype(compute_dtype)

    # fc2 + ReLU
    h = jnp.dot(h, w2_ref[...], preferred_element_type=jnp.float32)
    h = jnp.maximum(h.astype(epi_dtype) + b2_ref[...], 0.0).astype(compute_dtype)

    # fc3_action | fc3_step fused into one (tile_b, 2*h3) matmul; the lanes
    # are exactly cat([x_action, x_step]).
    h3 = jnp.dot(h, w3_ref[...], preferred_element_type=jnp.float32)
    h3 = jnp.maximum(h3.astype(epi_dtype) + b3_ref[...], 0.0).astype(compute_dtype)

    # Fused output heads: block-diagonal (2*h3, 128) weight, zero-padded, so
    # one matmul produces [pre_action | pre_step | 0...] lane-dense (f32).
    pre = jnp.dot(h3, wh_ref[...], preferred_element_type=jnp.float32) + bh_ref[...]

    # sigmoid = 1 / (1 + exp(-pre)); exp + approx reciprocal both hit the EUP
    # slot, keeping the divide off the VPU.
    sig = pl.reciprocal(1.0 + jnp.exp(-pre), approx=True)

    lane = jax.lax.broadcasted_iota(jnp.int32, pre.shape, 1)
    out = jnp.where(lane < action_num,
                    sig,                         # fc_action head
                    jnp.maximum(pre, 0.0))       # fc_step head (pad lanes stay 0)
    out_ref[...] = out.astype(out_ref.dtype)


# --------------------------------------------------------------------------
# One-time weight packing (hoisted out of the per-call path)
# --------------------------------------------------------------------------
def pack_params(params, *, compute_dtype=jnp.bfloat16, epi_dtype=None):
    """Transpose to (in, out), fuse fc3 branches, build block-diag heads, cast."""
    if epi_dtype is None:
        epi_dtype = _default_epilogue_dtype()

    h3 = params["fc3_action_w"].shape[0]
    action_num = params["fc_action_w"].shape[0]
    step_num = params["fc_step_w"].shape[0]
    head_pad = _round_up(max(action_num + step_num, 128), 128)

    w1 = params["fc1_w"].T.astype(compute_dtype)                       # (state, h1)
    b1 = params["fc1_b"][None, :].astype(epi_dtype)
    w2 = params["fc2_w"].T.astype(compute_dtype)                       # (h1, h2)
    b2 = params["fc2_b"][None, :].astype(epi_dtype)

    # fc3_action | fc3_step side-by-side: (h2, 2*h3)
    w3 = jnp.concatenate(
        [params["fc3_action_w"].T, params["fc3_step_w"].T], axis=1
    ).astype(compute_dtype)
    b3 = jnp.concatenate(
        [params["fc3_action_b"], params["fc3_step_b"]]
    )[None, :].astype(epi_dtype)

    # Block-diagonal, lane-padded heads: (2*h3, head_pad)
    wh = jnp.zeros((2 * h3, head_pad), jnp.float32)
    wh = wh.at[:h3, :action_num].set(params["fc_action_w"].T)
    wh = wh.at[h3:, action_num:action_num + step_num].set(params["fc_step_w"].T)
    wh = wh.astype(compute_dtype)

    bh = jnp.zeros((1, head_pad), jnp.float32)
    bh = bh.at[0, :action_num].set(params["fc_action_b"])
    bh = bh.at[0, action_num:action_num + step_num].set(params["fc_step_b"])

    return dict(w1=w1, b1=b1, w2=w2, b2=b2, w3=w3, b3=b3, wh=wh, bh=bh,
                action_num=int(action_num), step_num=int(step_num),
                head_pad=int(head_pad), compute_dtype=compute_dtype,
                epi_dtype=epi_dtype)


# --------------------------------------------------------------------------
# Wrapper
# --------------------------------------------------------------------------
def actor_net_forward(x, packed, *, tile_b=512):
    B, state_num = x.shape
    action_num = packed["action_num"]
    step_num = packed["step_num"]
    head_pad = packed["head_pad"]
    compute_dtype = packed["compute_dtype"]

    kind = _device_kind()
    if "v5e" in kind or "v5 lite" in kind:
        tile_b = min(tile_b, 256)        # 16 MiB scoped-VMEM default, 1 vst slot

    # Batch tiling: few fat tiles; >=2 parallel steps on v7x (2 TensorCores).
    min_steps = _min_parallel_steps() if B >= 32 else 1
    tb = min(tile_b, pl.cdiv(B, min_steps))
    tb = _round_up(tb, 16) if tb >= 16 else _round_up(max(tb, 1), 8)
    grid = pl.cdiv(B, tb)

    x = x.astype(compute_dtype)          # bf16 input halves HBM->VMEM bytes

    kernel = functools.partial(
        actor_kernel,
        action_num=action_num,
        compute_dtype=compute_dtype,
        epi_dtype=packed["epi_dtype"],
    )

    def resident(shape):
        # Weights/biases: same block every grid step -> VMEM-resident,
        # single-buffered (no second pipeline buffer needed).
        try:
            return pl.BlockSpec(shape, lambda i: (0, 0),
                                pipeline_mode=pl.Buffered(1))
        except TypeError:
            return pl.BlockSpec(shape, lambda i: (0, 0))

    out = pl.pallas_call(
        kernel,
        out_shape=jax.ShapeDtypeStruct((B, head_pad), jnp.bfloat16),
        grid_spec=pltpu.PrefetchScalarGridSpec(
            num_scalar_prefetch=0,
            grid=(grid,),
            in_specs=[
                pl.BlockSpec((tb, state_num), lambda i: (i, 0)),
                resident(packed["w1"].shape), resident(packed["b1"].shape),
                resident(packed["w2"].shape), resident(packed["b2"].shape),
                resident(packed["w3"].shape), resident(packed["b3"].shape),
                resident(packed["wh"].shape), resident(packed["bh"].shape),
            ],
            out_specs=pl.BlockSpec((tb, head_pad), lambda i: (i, 0)),
        ),
        compiler_params=pltpu.CompilerParams(
            dimension_semantics=("parallel",),
        ),
    )(x, packed["w1"], packed["b1"], packed["w2"], packed["b2"],
      packed["w3"], packed["b3"], packed["wh"], packed["bh"])

    out_action = out[:, :action_num]
    out_step = out[:, action_num:action_num + step_num]
    return out_action, out_step


# --------------------------------------------------------------------------
# Init + pure-JAX reference (mirrors the kernel's bf16 MXU / epilogue numerics)
# --------------------------------------------------------------------------
def init_params(key, state_num, action_num, step_num, h1=256, h2=256, h3=256):
    """torch.nn.Linear default init: U[-1/sqrt(fan_in), 1/sqrt(fan_in)]."""
    def linear(k, out_f, in_f):
        kw, kb = jax.random.split(k)
        bound = 1.0 / jnp.sqrt(in_f)
        w = jax.random.uniform(kw, (out_f, in_f), jnp.float32, -bound, bound)
        b = jax.random.uniform(kb, (out_f,), jnp.float32, -bound, bound)
        return w, b

    keys = jax.random.split(key, 6)
    p = {}
    p["fc1_w"], p["fc1_b"] = linear(keys[0], h1, state_num)
    p["fc2_w"], p["fc2_b"] = linear(keys[1], h2, h1)
    p["fc3_action_w"], p["fc3_action_b"] = linear(keys[2], h3, h2)
    p["fc3_step_w"], p["fc3_step_b"] = linear(keys[3], h3, h2)
    p["fc_action_w"], p["fc_action_b"] = linear(keys[4], action_num, h3)
    p["fc_step_w"], p["fc_step_b"] = linear(keys[5], step_num, h3)
    return p


def actor_net_ref(x, p, compute_dtype=jnp.bfloat16, epi_dtype=None):
    if epi_dtype is None:
        epi_dtype = _default_epilogue_dtype()

    def lin(h, w, b, out_dtype):
        acc = jnp.dot(h.astype(compute_dtype), w.T.astype(compute_dtype),
                      preferred_element_type=jnp.float32)
        return acc.astype(out_dtype) + b.astype(out_dtype)

    h = jax.nn.relu(lin(x, p["fc1_w"], p["fc1_b"], epi_dtype))
    h = jax.nn.relu(lin(h, p["fc2_w"], p["fc2_b"], epi_dtype))
    xa = jax.nn.relu(lin(h, p["fc3_action_w"], p["fc3_action_b"], epi_dtype))
    xs = jax.nn.relu(lin(h, p["fc3_step_w"], p["fc3_step_b"], epi_dtype))
    out_a = jax.nn.sigmoid(lin(xa, p["fc_action_w"], p["fc_action_b"], jnp.float32))
    out_s = jax.nn.relu(lin(xs, p["fc_step_w"], p["fc_step_b"], jnp.float32))
    return out_a, out_s


# --------------------------------------------------------------------------
if __name__ == "__main__":
    B, STATE, ACTION, STEP = 64, 32, 8, 8
    H1 = H2 = H3 = 256  # module defaults

    key = jax.random.PRNGKey(0)
    kp, kx = jax.random.split(key)
    params = init_params(kp, STATE, ACTION, STEP, H1, H2, H3)
    packed = pack_params(params)          # hoisted one-time weight packing

    x = jax.random.normal(kx, (B, STATE), jnp.float32)

    out_action, out_step = actor_net_forward(x, packed)   # default fat tiling
    out_action, out_step = jax.block_until_ready((out_action, out_step))

    ref_action, ref_step = actor_net_ref(x, params)

    assert out_action.shape == (B, ACTION)
    assert out_step.shape == (B, STEP)
    assert jnp.allclose(out_action.astype(jnp.float32), ref_action,
                        atol=2e-2, rtol=2e-2)
    assert jnp.allclose(out_step.astype(jnp.float32), ref_step,
                        atol=2e-2, rtol=2e-2)

    print("KERNEL_OK")
</pallas_src>

<mosaic_0001>
module attributes {stable_mosaic.version = 11 : i64} {
  func.func @actor_kernel(%arg0: i32, %arg1: memref<64x32xbf16, #tpu.memory_space<vmem>>, %arg2: memref<32x256xbf16, #tpu.memory_space<vmem>>, %arg3: memref<1x256xf32, #tpu.memory_space<vmem>>, %arg4: memref<256x256xbf16, #tpu.memory_space<vmem>>, %arg5: memref<1x256xf32, #tpu.memory_space<vmem>>, %arg6: memref<256x512xbf16, #tpu.memory_space<vmem>>, %arg7: memref<1x512xf32, #tpu.memory_space<vmem>>, %arg8: memref<512x128xbf16, #tpu.memory_space<vmem>>, %arg9: memref<1x128xf32, #tpu.memory_space<vmem>>, %arg10: memref<64x128xbf16, #tpu.memory_space<vmem>>) attributes {dimension_semantics = [#tpu.dimension_semantics<parallel>], iteration_bounds = array<i64: 1>, scalar_prefetch = 0 : i64, scratch_operands = 0 : i64, tpu.core_type = #tpu.core_type<tc>, window_params = [{transform_indices = @transform_0, window_bounds = array<i64: 64, 32>}, {pipeline_mode = #tpu.pipeline_mode<synchronous>, transform_indices = @transform_1, window_bounds = array<i64: 32, 256>}, {pipeline_mode = #tpu.pipeline_mode<synchronous>, transform_indices = @transform_2, window_bounds = array<i64: 1, 256>}, {pipeline_mode = #tpu.pipeline_mode<synchronous>, transform_indices = @transform_3, window_bounds = array<i64: 256, 256>}, {pipeline_mode = #tpu.pipeline_mode<synchronous>, transform_indices = @transform_4, window_bounds = array<i64: 1, 256>}, {pipeline_mode = #tpu.pipeline_mode<synchronous>, transform_indices = @transform_5, window_bounds = array<i64: 256, 512>}, {pipeline_mode = #tpu.pipeline_mode<synchronous>, transform_indices = @transform_6, window_bounds = array<i64: 1, 512>}, {pipeline_mode = #tpu.pipeline_mode<synchronous>, transform_indices = @transform_7, window_bounds = array<i64: 512, 128>}, {pipeline_mode = #tpu.pipeline_mode<synchronous>, transform_indices = @transform_8, window_bounds = array<i64: 1, 128>}, {transform_indices = @transform_9, window_bounds = array<i64: 64, 128>}]} {
    %c0 = arith.constant 0 : index
    %c0_0 = arith.constant 0 : index
    %0 = vector.load %arg1[%c0, %c0_0] : memref<64x32xbf16, #tpu.memory_space<vmem>>, vector<64x32xbf16>
    %c0_1 = arith.constant 0 : index
    %c0_2 = arith.constant 0 : index
    %1 = vector.load %arg2[%c0_1, %c0_2] : memref<32x256xbf16, #tpu.memory_space<vmem>>, vector<32x256xbf16>
    %cst = arith.constant dense<0.000000e+00> : vector<64x256xf32>
    %2 = tpu.matmul %0, %1, %cst {dimension_numbers = #tpu.dot_dimension_numbers<[1], [0], [0], [1], [0, 0, 1, 1], [], []>} : vector<64x32xbf16>, vector<32x256xbf16>, vector<64x256xf32> -> vector<64x256xf32>
    %c0_3 = arith.constant 0 : index
    %c0_4 = arith.constant 0 : index
    %3 = vector.load %arg3[%c0_3, %c0_4] : memref<1x256xf32, #tpu.memory_space<vmem>>, vector<1x256xf32>
    %4 = vector.broadcast %3 : vector<1x256xf32> to vector<64x256xf32>
    %5 = arith.addf %2, %4 : vector<64x256xf32>
    %cst_5 = arith.constant 0.000000e+00 : f32
    %6 = vector.broadcast %cst_5 : f32 to vector<64x256xf32>
    %7 = arith.maximumf %5, %6 : vector<64x256xf32>
    %8 = arith.truncf %7 : vector<64x256xf32> to vector<64x256xbf16>
    %c0_6 = arith.constant 0 : index
    %c0_7 = arith.constant 0 : index
    %9 = vector.load %arg4[%c0_6, %c0_7] : memref<256x256xbf16, #tpu.memory_space<vmem>>, vector<256x256xbf16>
    %cst_8 = arith.constant dense<0.000000e+00> : vector<64x256xf32>
    %10 = tpu.matmul %8, %9, %cst_8 {dimension_numbers = #tpu.dot_dimension_numbers<[1], [0], [0], [1], [0, 0, 1, 1], [], []>} : vector<64x256xbf16>, vector<256x256xbf16>, vector<64x256xf32> -> vector<64x256xf32>
    %c0_9 = arith.constant 0 : index
    %c0_10 = arith.constant 0 : index
    %11 = vector.load %arg5[%c0_9, %c0_10] : memref<1x256xf32, #tpu.memory_space<vmem>>, vector<1x256xf32>
    %12 = vector.broadcast %11 : vector<1x256xf32> to vector<64x256xf32>
    %13 = arith.addf %10, %12 : vector<64x256xf32>
    %cst_11 = arith.constant 0.000000e+00 : f32
    %14 = vector.broadcast %cst_11 : f32 to vector<64x256xf32>
    %15 = arith.maximumf %13, %14 : vector<64x256xf32>
    %16 = arith.truncf %15 : vector<64x256xf32> to vector<64x256xbf16>
    %c0_12 = arith.constant 0 : index
    %c0_13 = arith.constant 0 : index
    %17 = vector.load %arg6[%c0_12, %c0_13] : memref<256x512xbf16, #tpu.memory_space<vmem>>, vector<256x512xbf16>
    %cst_14 = arith.constant dense<0.000000e+00> : vector<64x512xf32>
    %18 = tpu.matmul %16, %17, %cst_14 {dimension_numbers = #tpu.dot_dimension_numbers<[1], [0], [0], [1], [0, 0, 1, 1], [], []>} : vector<64x256xbf16>, vector<256x512xbf16>, vector<64x512xf32> -> vector<64x512xf32>
    %c0_15 = arith.constant 0 : index
    %c0_16 = arith.constant 0 : index
    %19 = vector.load %arg7[%c0_15, %c0_16] : memref<1x512xf32, #tpu.memory_space<vmem>>, vector<1x512xf32>
    %20 = vector.broadcast %19 : vector<1x512xf32> to vector<64x512xf32>
    %21 = arith.addf %18, %20 : vector<64x512xf32>
    %cst_17 = arith.constant 0.000000e+00 : f32
    %22 = vector.broadcast %cst_17 : f32 to vector<64x512xf32>
    %23 = arith.maximumf %21, %22 : vector<64x512xf32>
    %24 = arith.truncf %23 : vector<64x512xf32> to vector<64x512xbf16>
    %c0_18 = arith.constant 0 : index
    %c0_19 = arith.constant 0 : index
    %25 = vector.load %arg8[%c0_18, %c0_19] : memref<512x128xbf16, #tpu.memory_space<vmem>>, vector<512x128xbf16>
    %cst_20 = arith.constant dense<0.000000e+00> : vector<64x128xf32>
    %26 = tpu.matmul %24, %25, %cst_20 {dimension_numbers = #tpu.dot_dimension_numbers<[1], [0], [0], [1], [0, 0, 1, 1], [], []>} : vector<64x512xbf16>, vector<512x128xbf16>, vector<64x128xf32> -> vector<64x128xf32>
    %c0_21 = arith.constant 0 : index
    %c0_22 = arith.constant 0 : index
    %27 = vector.load %arg9[%c0_21, %c0_22] : memref<1x128xf32, #tpu.memory_space<vmem>>, vector<1x128xf32>
    %28 = vector.broadcast %27 : vector<1x128xf32> to vector<64x128xf32>
    %29 = arith.addf %26, %28 : vector<64x128xf32>
    %cst_23 = arith.constant 0.000000e+00 : f32
    %30 = vector.broadcast %cst_23 : f32 to vector<64x128xf32>
    %31 = arith.subf %30, %29 : vector<64x128xf32>
    %32 = math.exp %31 : vector<64x128xf32>
    %cst_24 = arith.constant 1.000000e+00 : f32
    %33 = vector.broadcast %cst_24 : f32 to vector<64x128xf32>
    %34 = arith.addf %33, %32 : vector<64x128xf32>
    %35 = tpu.reciprocal %34 {approx = true} : vector<64x128xf32> -> vector<64x128xf32>
    %36 = tpu.iota {dimensions = array<i32: 1>} : vector<64x128xi32>
    %c8_i32 = arith.constant 8 : i32
    %37 = vector.broadcast %c8_i32 : i32 to vector<64x128xi32>
    %38 = arith.cmpi slt, %36, %37 : vector<64x128xi32>
    %cst_25 = arith.constant 0.000000e+00 : f32
    %39 = vector.broadcast %cst_25 : f32 to vector<64x128xf32>
    %40 = arith.maximumf %29, %39 : vector<64x128xf32>
    %41 = arith.select %38, %35, %40 : vector<64x128xi1>, vector<64x128xf32>
    %42 = arith.truncf %41 : vector<64x128xf32> to vector<64x128xbf16>
    %c0_26 = arith.constant 0 : index
    %c0_27 = arith.constant 0 : index
    %43 = vector.load %arg10[%c0_26, %c0_27] : memref<64x128xbf16, #tpu.memory_space<vmem>>, vector<64x128xbf16>
    tpu.vector_store %arg10[%c0_26, %c0_27], %42 {strides = array<i32>} : memref<64x128xbf16, #tpu.memory_space<vmem>>, vector<64x128xbf16>,
    return
  }
  func.func @transform_0(%arg0: i32) -> (i32, i32) {
    %c0_i32 = arith.constant 0 : i32
    %c0_i32_0 = arith.constant 0 : i32
    return %arg0, %c0_i32 : i32, i32
  }
  func.func @transform_1(%arg0: i32) -> (i32, i32) {
    %c0_i32 = arith.constant 0 : i32
    %c0_i32_0 = arith.constant 0 : i32
    %c0_i32_1 = arith.constant 0 : i32
    return %c0_i32, %c0_i32_0 : i32, i32
  }
  func.func @transform_2(%arg0: i32) -> (i32, i32) {
    %c0_i32 = arith.constant 0 : i32
    %c0_i32_0 = arith.constant 0 : i32
    %c0_i32_1 = arith.constant 0 : i32
    return %c0_i32, %c0_i32_0 : i32, i32
  }
  func.func @transform_3(%arg0: i32) -> (i32, i32) {
    %c0_i32 = arith.constant 0 : i32
    %c0_i32_0 = arith.constant 0 : i32
    %c0_i32_1 = arith.constant 0 : i32
    return %c0_i32, %c0_i32_0 : i32, i32
  }
  func.func @transform_4(%arg0: i32) -> (i32, i32) {
    %c0_i32 = arith.constant 0 : i32
    %c0_i32_0 = arith.constant 0 : i32
    %c0_i32_1 = arith.constant 0 : i32
    return %c0_i32, %c0_i32_0 : i32, i32
  }
  func.func @transform_5(%arg0: i32) -> (i32, i32) {
    %c0_i32 = arith.constant 0 : i32
    %c0_i32_0 = arith.constant 0 : i32
    %c0_i32_1 = arith.constant 0 : i32
    return %c0_i32, %c0_i32_0 : i32, i32
  }
  func.func @transform_6(%arg0: i32) -> (i32, i32) {
    %c0_i32 = arith.constant 0 : i32
    %c0_i32_0 = arith.constant 0 : i32
    %c0_i32_1 = arith.constant 0 : i32
    return %c0_i32, %c0_i32_0 : i32, i32
  }
  func.func @transform_7(%arg0: i32) -> (i32, i32) {
    %c0_i32 = arith.constant 0 : i32
    %c0_i32_0 = arith.constant 0 : i32
    %c0_i32_1 = arith.constant 0 : i32
    return %c0_i32, %c0_i32_0 : i32, i32
  }
  func.func @transform_8(%arg0: i32) -> (i32, i32) {
    %c0_i32 = arith.constant 0 : i32
    %c0_i32_0 = arith.constant 0 : i32
    %c0_i32_1 = arith.constant 0 : i32
    return %c0_i32, %c0_i32_0 : i32, i32
  }
  func.func @transform_9(%arg0: i32) -> (i32, i32) {
    %c0_i32 = arith.constant 0 : i32
    %c0_i32_0 = arith.constant 0 : i32
    return %arg0, %c0_i32 : i32, i32
  }
}

</mosaic_0001>

<llo_original>
// kernel: tpu_custom_call.1
$region0: #{tpu_custom_call.1}
  #allocation0 [shape = 'u32[]', space=smem, size = 0x4, offset = 0x4, fixed_abs, tag = 'smem constant byte address 0x4 - core index']
  #allocation1 [shape = 'u32[144,128]{1,0:T(1,128)}', space=vmem, size = 0x12000, scoped, tag = 'internal scratch']
  %s0 = inlined_call_operand.vmem [shape: bf16[64,32], index: 0, kind: input, shape index: {}]
  %s1 = inlined_call_operand.vmem [shape: bf16[32,256], index: 1, kind: input, shape index: {}]
  %s2 = inlined_call_operand.vmem [shape: f32[1,256], index: 2, kind: input, shape index: {}]
  %s3 = inlined_call_operand.hbm [shape: bf16[256,256], index: 3, kind: input, shape index: {}]
  %s4 = inlined_call_operand.vmem [shape: f32[1,256], index: 4, kind: input, shape index: {}]
  %s5 = inlined_call_operand.hbm [shape: bf16[256,512], index: 5, kind: input, shape index: {}]
  %s6 = inlined_call_operand.vmem [shape: f32[1,512], index: 6, kind: input, shape index: {}]
  %s7 = inlined_call_operand.hbm [shape: bf16[512,128], index: 7, kind: input, shape index: {}]
  %s8 = inlined_call_operand.vmem [shape: f32[1,128], index: 8, kind: input, shape index: {}]
  %s9 = inlined_call_operand.hbm [shape: bf16[64,128], index: 9, kind: output, shape index: {}]
  %s10 = sld [smem:[#allocation0]]
  $region58: #{tpu_custom_call.1} parent=0
    _
  %s12 = ssub.s32 1, %s10
  %s13 = scalar_select 0, %s12, %s10
  $region1: #{tpu_custom_call.1} parent=0
    #allocation2 [shape = 'u8[131072]{0}', space=vmem, size = 0x20000, scoped, tag = 'input window, operand 3, single buffered']
    #allocation3 [shape = 's32[1]{0}', space=sflag, size = 0x4, scoped, tag = 'scoped memory for tpu_custom_call.1']
    #allocation4 [shape = 's32[1]{0}', space=sflag, size = 0x4, scoped, tag = 'scoped memory for tpu_custom_call.1']
    #allocation5 [shape = 'u8[262144]{0}', space=vmem, size = 0x40000, scoped, tag = 'input window, operand 5, single buffered']
    #allocation6 [shape = 's32[1]{0}', space=sflag, size = 0x4, scoped, tag = 'scoped memory for tpu_custom_call.1']
    #allocation7 [shape = 'u8[131072]{0}', space=vmem, size = 0x20000, scoped, tag = 'input window, operand 7, single buffered']
    #allocation8 [shape = 'u8[16384]{0}', space=vmem, size = 0x4000, scoped, tag = 'output window, operand 0, single buffered']
    %14 = vsyncpa [#allocation3], 0
    %15 = vsyncpa [#allocation6], 0
    %16 = vsyncpa [#allocation4], 0
    // Predicated region
    $region2: #{tpu_custom_call.1} parent=1 // pred_check
      _
    $region3: #{tpu_custom_call.1} parent=1 // pred_check_branch
      %18 = sbr.rel (0) target = $region5
    $region4: #{tpu_custom_call.1} parent=1 // pred_region
      _
    $region5: #{tpu_custom_call.1} parent=1 // pred_fallthru
      _
    // Predicated region
    $region6: #{tpu_custom_call.1} parent=1 // pred_check
      _
    $region7: #{tpu_custom_call.1} parent=1 // pred_check_branch
      %20 = sbr.rel (0) target = $region9
    $region8: #{tpu_custom_call.1} parent=1 // pred_region
      _
    $region9: #{tpu_custom_call.1} parent=1 // pred_fallthru
      _
    // Predicated region
    $region10: #{tpu_custom_call.1} parent=1 // pred_check
      _
    $region11: #{tpu_custom_call.1} parent=1 // pred_check_branch
      %22 = sbr.rel (0) target = $region13
    $region12: #{tpu_custom_call.1} parent=1 // pred_region
      _
    $region13: #{tpu_custom_call.1} parent=1 // pred_fallthru
      _
    // Predicated region
    $region14: #{tpu_custom_call.1} parent=1 // pred_check
      _
    $region15: #{tpu_custom_call.1} parent=1 // pred_check_branch
      %24 = sbr.rel (0) target = $region17
    $region16: #{tpu_custom_call.1} parent=1 // pred_region
      %s26 = ssub.s32 4096, 4096
      %27 = vsyncadd [#allocation3], %s26
      %s28 = sshll.u32 [#allocation2], 4
      %s29 = int_to_ptr.vmem [resolvable:$true] %s28
      %34 = dma.hbm_to_vmem [thread:$0]  %s3, 4096, %s29, [#allocation3], 128, 128, 8
    $region17: #{tpu_custom_call.1} parent=1 // pred_fallthru
      _
    // Predicated region
    $region18: #{tpu_custom_call.1} parent=1 // pred_check
      _
    $region19: #{tpu_custom_call.1} parent=1 // pred_check_branch
      %36 = sbr.rel (0) target = $region21
    $region20: #{tpu_custom_call.1} parent=1 // pred_region
      _
    $region21: #{tpu_custom_call.1} parent=1 // pred_fallthru
      _
    // Predicated region
    $region22: #{tpu_custom_call.1} parent=1 // pred_check
      _
    $region23: #{tpu_custom_call.1} parent=1 // pred_check_branch
      %38 = sbr.rel (0) target = $region25
    $region24: #{tpu_custom_call.1} parent=1 // pred_region
      %s40 = ssub.s32 8192, 8192
      %41 = vsyncadd [#allocation6], %s40
      %s42 = sshll.u32 [#allocation5], 4
      %s43 = int_to_ptr.vmem [resolvable:$true] %s42
      %48 = dma.hbm_to_vmem [thread:$0]  %s5, 8192, %s43, [#allocation6], 256, 256, 16
    $region25: #{tpu_custom_call.1} parent=1 // pred_fallthru
      _
    // Predicated region
    $region26: #{tpu_custom_call.1} parent=1 // pred_check
      _
    $region27: #{tpu_custom_call.1} parent=1 // pred_check_branch
      %50 = sbr.rel (0) target = $region29
    $region28: #{tpu_custom_call.1} parent=1 // pred_region
      _
    $region29: #{tpu_custom_call.1} parent=1 // pred_fallthru
      _
    // Predicated region
    $region30: #{tpu_custom_call.1} parent=1 // pred_check
      _
    $region31: #{tpu_custom_call.1} parent=1 // pred_check_branch
      %52 = sbr.rel (0) target = $region33
    $region32: #{tpu_custom_call.1} parent=1 // pred_region
      %s54 = ssub.s32 4096, 4096
      %55 = vsyncadd [#allocation6], %s54
      %s56 = sshll.u32 [#allocation7], 4
      %s57 = int_to_ptr.vmem [resolvable:$true] %s56
      %62 = dma.hbm_to_vmem [thread:$0]  %s7, 4096, %s57, [#allocation6], 64, 64, 4
    $region33: #{tpu_custom_call.1} parent=1 // pred_fallthru
      _
    // Predicated region
    $region34: #{tpu_custom_call.1} parent=1 // pred_check
      _
    $region35: #{tpu_custom_call.1} parent=1 // pred_check_branch
      %64 = sbr.rel (0) target = $region37
    $region36: #{tpu_custom_call.1} parent=1 // pred_region
      _
    $region37: #{tpu_custom_call.1} parent=1 // pred_fallthru
      _
    // Predicated region
    $region38: #{tpu_custom_call.1} parent=1 // pred_check
      _
    $region39: #{tpu_custom_call.1} parent=1 // pred_check_branch
      %66 = sbr.rel (0) target = $region41
    $region40: #{tpu_custom_call.1} parent=1 // pred_region
      %67 = dma.done [#allocation3], 4096
    $region41: #{tpu_custom_call.1} parent=1 // pred_fallthru
      _
    // Predicated region
    $region42: #{tpu_custom_call.1} parent=1 // pred_check
      _
    $region43: #{tpu_custom_call.1} parent=1 // pred_check_branch
      %69 = sbr.rel (0) target = $region45
    $region44: #{tpu_custom_call.1} parent=1 // pred_region
      %70 = dma.done [#allocation6], 8192
    $region45: #{tpu_custom_call.1} parent=1 // pred_fallthru
      _
    // Predicated region
    $region46: #{tpu_custom_call.1} parent=1 // pred_check
      _
    $region47: #{tpu_custom_call.1} parent=1 // pred_check_branch
      %72 = sbr.rel (0) target = $region49
    $region48: #{tpu_custom_call.1} parent=1 // pred_region
      %73 = dma.done [#allocation6], 4096
    $region49: #{tpu_custom_call.1} parent=1 // pred_fallthru
      _
    %v75 = vld [vmem:[%s0] sm:$0xf]
    %v76 = vld [vmem:[%s0 + $0x4] sm:$0xf]
    %v77 = vld [vmem:[%s0 + $0x8] sm:$0xf]
    %v78 = vld [vmem:[%s0 + $0xc] sm:$0xf]
    %v79 = vld [vmem:[%s0 + $0x10] sm:$0xf]
    %v80 = vld [vmem:[%s0 + $0x14] sm:$0xf]
    %v81 = vld [vmem:[%s0 + $0x18] sm:$0xf]
    %v82 = vld [vmem:[%s0 + $0x1c] sm:$0xf]
    %v83 = vld [vmem:[%s1] sm:$0xff]
    %v84 = vld [vmem:[%s1 + $0x8] sm:$0xff]
    %v85 = vld [vmem:[%s1 + $0x10] sm:$0xff]
    %v86 = vld [vmem:[%s1 + $0x18] sm:$0xff]
    %v87 = vld [vmem:[%s2] sm:$0x3]
    %v89 = vlaneseq
    %v90 = vshrl.u32 %v89, 7
    %v91 = vsub.s32 0, %v90
    %v92 = vrot.slane %v87, %v91
    %v93 = vlaneseq
    %v94 = vshrl.u32 %v93, 7
    %v95 = vsub.s32 1, %v94
    %v96 = vrot.slane %v87, %v95
    %v107 = vunpack.c.l.b16 %v75
    %v108 = vunpack.c.l.b16 %v76
    %v109 = vunpack.c.l.b16 %v77
    %v110 = vunpack.c.l.b16 %v78
    %v111 = vunpack.c.l.b16 %v79
    %v112 = vunpack.c.l.b16 %v80
    %v113 = vunpack.c.l.b16 %v81
    %v114 = vunpack.c.l.b16 %v82
    %v115 = vpack.c.b16 %v108, %v107
    %v116 = vpack.c.b16 %v110, %v109
    %v117 = vpack.c.b16 %v112, %v111
    %v118 = vpack.c.b16 %v114, %v113
    %v123 = vunpack.c.l.b16 %v83
    %v124 = vunpack.c.h.b16 %v83
    %v125 = vunpack.c.l.b16 %v84
    %v126 = vunpack.c.h.b16 %v84
    %v127 = vunpack.c.l.b16 %v85
    %v128 = vunpack.c.h.b16 %v85
    %v129 = vunpack.c.l.b16 %v86
    %v130 = vunpack.c.h.b16 %v86
    %v131 = vpack.c.b16 %v125, %v123
    %v132 = vpack.c.b16 %v126, %v124
    %v133 = vpack.c.b16 %v129, %v127
    %v134 = vpack.c.b16 %v130, %v128
    %vm139 = vcmask 261120
    %v141 = vsel %vm139, %v115, 0
    %v144 = vsel %vm139, %v116, 0
    %v147 = vsel %vm139, %v117, 0
    %v150 = vsel %vm139, %v118, 0
    %152 = vmatprep.subr.bf16.mxu0 0
    %153 = vmatpush1.bf16.msra.mxu0 0
    %154 = vmatprep.subr.bf16.mxu0 0
    %155 = vmatpush1.bf16.msra.mxu0 0
    %156 = vmatprep.subr.bf16.mxu0 0
    %157 = vmatpush1.bf16.msra.mxu0 0
    %158 = vmatprep.subr.bf16.mxu0 0
    %159 = vmatpush1.bf16.msra.mxu0 0
    %160 = vmatprep.subr.bf16.mxu0 0
    %161 = vmatpush1.bf16.msra.mxu0 0
    %162 = vmatprep.subr.bf16.mxu0 0
    %163 = vmatpush1.bf16.msra.mxu0 0
    %164 = vmatprep.subr.bf16.mxu0 %v134
    %165 = vmatpush1.bf16.msra.mxu0 %v133
    %166 = vmatprep.subr.bf16.mxu0 %v132
    %167 = vmatpush1.bf16.msra.mxu0 %v131
    %168 = vmatprep.subr.bf16.mxu0 0
    %169 = vmatpush2.bf16.msra.mxu0 0
    %170 = vmatprep.subr.bf16.mxu0 0
    %171 = vmatpush2.bf16.msra.mxu0 0
    %172 = vmatprep.subr.bf16.mxu0 0
    %173 = vmatpush2.bf16.msra.mxu0 0
    %174 = vmatprep.subr.bf16.mxu0 0
    %175 = vmatpush2.bf16.msra.mxu0 0
    %176 = vmatprep.subr.bf16.mxu0 0
    %177 = vmatpush2.bf16.msra.mxu0 0
    %178 = vmatprep.subr.bf16.mxu0 0
    %179 = vmatpush2.bf16.msra.mxu0 0
    %180 = vmatprep.subr.bf16.mxu0 0
    %181 = vmatpush2.bf16.msra.mxu0 0
    %182 = vmatprep.subr.bf16.mxu0 0
    %183 = vmatpush2.bf16.msra.mxu0 0
    %184 = vmatprep.mubr.bf16.mxu0 0
    %185 = vmatmul.mubr.bf16.gmra.mxu0 %v141
    %v186 = vpop.f32.mrf.mxu0
    %v187 = vadd.f32 %v92, %v186
    %v188 = vpop.f32.mrf.mxu0
    %v189 = vadd.f32 %v96, %v188
    %v190 = vpop.f32.mrf.mxu0
    %v191 = vadd.f32 %v92, %v190
    %v192 = vpop.f32.mrf.mxu0
    %v193 = vadd.f32 %v96, %v192
    %194 = vmatprep.mubr.bf16.mxu0 0
    %195 = vmatmul.mubr.bf16.gmra.mxu0 %v144
    %v196 = vpop.f32.mrf.mxu0
    %v197 = vadd.f32 %v92, %v196
    %v198 = vpop.f32.mrf.mxu0
    %v199 = vadd.f32 %v96, %v198
    %v200 = vpop.f32.mrf.mxu0
    %v201 = vadd.f32 %v92, %v200
    %v202 = vpop.f32.mrf.mxu0
    %v203 = vadd.f32 %v96, %v202
    %204 = vmatprep.mubr.bf16.mxu0 0
    %205 = vmatmul.mubr.bf16.gmra.mxu0 %v147
    %v206 = vpop.f32.mrf.mxu0
    %v207 = vadd.f32 %v92, %v206
    %v208 = vpop.f32.mrf.mxu0
    %v209 = vadd.f32 %v96, %v208
    %v210 = vpop.f32.mrf.mxu0
    %v211 = vadd.f32 %v92, %v210
    %v212 = vpop.f32.mrf.mxu0
    %v213 = vadd.f32 %v96, %v212
    %214 = vmatprep.mubr.bf16.mxu0 0
    %215 = vmatmul.mubr.bf16.gmra.mxu0 %v150
    %v216 = vpop.f32.mrf.mxu0
    %v217 = vadd.f32 %v92, %v216
    %v218 = vpop.f32.mrf.mxu0
    %v219 = vadd.f32 %v96, %v218
    %v220 = vpop.f32.mrf.mxu0
    %v221 = vadd.f32 %v92, %v220
    %v222 = vpop.f32.mrf.mxu0
    %v223 = vadd.f32 %v96, %v222
    %224 = vdwg.mxu0
    %v225 = vmax.f32 %v187, 0.0
    %v226 = vmax.f32 %v189, 0.0
    %v227 = vmax.f32 %v191, 0.0
    %v228 = vmax.f32 %v193, 0.0
    %v229 = vmax.f32 %v197, 0.0
    %v230 = vmax.f32 %v199, 0.0
    %v231 = vmax.f32 %v201, 0.0
    %v232 = vmax.f32 %v203, 0.0
    %v233 = vmax.f32 %v207, 0.0
    %v234 = vmax.f32 %v209, 0.0
    %v235 = vmax.f32 %v211, 0.0
    %v236 = vmax.f32 %v213, 0.0
    %v237 = vmax.f32 %v217, 0.0
    %v238 = vmax.f32 %v219, 0.0
    %v239 = vmax.f32 %v221, 0.0
    %v240 = vmax.f32 %v223, 0.0
    %v241 = vpack.c.bf16 %v227, %v225
    %v242 = vpack.c.bf16 %v228, %v226
    %v243 = vpack.c.bf16 %v231, %v229
    %v244 = vpack.c.bf16 %v232, %v230
    %v245 = vpack.c.bf16 %v235, %v233
    %v246 = vpack.c.bf16 %v236, %v234
    %v247 = vpack.c.bf16 %v239, %v237
    %v248 = vpack.c.bf16 %v240, %v238
    %v249 = vld [vmem:[#allocation2] sm:$0xff]
    %v250 = vld [vmem:[#allocation2 + $0x8] sm:$0xff]
    %v251 = vld [vmem:[#allocation2 + $0x10] sm:$0xff]
    %v252 = vld [vmem:[#allocation2 + $0x18] sm:$0xff]
    %v253 = vld [vmem:[#allocation2 + $0x20] sm:$0xff]
    %v254 = vld [vmem:[#allocation2 + $0x28] sm:$0xff]
    %v255 = vld [vmem:[#allocation2 + $0x30] sm:$0xff]
    %v256 = vld [vmem:[#allocation2 + $0x38] sm:$0xff]
    %v257 = vld [vmem:[#allocation2 + $0x40] sm:$0xff]
    %v258 = vld [vmem:[#allocation2 + $0x48] sm:$0xff]
    %v259 = vld [vmem:[#allocation2 + $0x50] sm:$0xff]
    %v260 = vld [vmem:[#allocation2 + $0x58] sm:$0xff]
    %v261 = vld [vmem:[#allocation2 + $0x60] sm:$0xff]
    %v262 = vld [vmem:[#allocation2 + $0x68] sm:$0xff]
    %v263 = vld [vmem:[#allocation2 + $0x70] sm:$0xff]
    %v264 = vld [vmem:[#allocation2 + $0x78] sm:$0xff]
    %v265 = vld [vmem:[#allocation2 + $0x80] sm:$0xff]
    %v266 = vld [vmem:[#allocation2 + $0x88] sm:$0xff]
    %v267 = vld [vmem:[#allocation2 + $0x90] sm:$0xff]
    %v268 = vld [vmem:[#allocation2 + $0x98] sm:$0xff]
    %v269 = vld [vmem:[#allocation2 + $0xa0] sm:$0xff]
    %v270 = vld [vmem:[#allocation2 + $0xa8] sm:$0xff]
    %v271 = vld [vmem:[#allocation2 + $0xb0] sm:$0xff]
    %v272 = vld [vmem:[#allocation2 + $0xb8] sm:$0xff]
    %v273 = vld [vmem:[#allocation2 + $0xc0] sm:$0xff]
    %v274 = vld [vmem:[#allocation2 + $0xc8] sm:$0xff]
    %v275 = vld [vmem:[#allocation2 + $0xd0] sm:$0xff]
    %v276 = vld [vmem:[#allocation2 + $0xd8] sm:$0xff]
    %v277 = vld [vmem:[#allocation2 + $0xe0] sm:$0xff]
    %v278 = vld [vmem:[#allocation2 + $0xe8] sm:$0xff]
    %v279 = vld [vmem:[#allocation2 + $0xf0] sm:$0xff]
    %v280 = vld [vmem:[#allocation2 + $0xf8] sm:$0xff]
    %v281 = vld [vmem:[%s4] sm:$0x3]
    %v283 = vlaneseq
    %v284 = vshrl.u32 %v283, 7
    %v285 = vsub.s32 0, %v284
    %v286 = vrot.slane %v281, %v285
    %v287 = vlaneseq
    %v288 = vshrl.u32 %v287, 7
    %v289 = vsub.s32 1, %v288
    %v290 = vrot.slane %v281, %v289
    %v325 = vunpack.c.l.b16 %v249
    %v326 = vunpack.c.h.b16 %v249
    %v327 = vunpack.c.l.b16 %v250
    %v328 = vunpack.c.h.b16 %v250
    %v329 = vunpack.c.l.b16 %v251
    %v330 = vunpack.c.h.b16 %v251
    %v331 = vunpack.c.l.b16 %v252
    %v332 = vunpack.c.h.b16 %v252
    %v333 = vunpack.c.l.b16 %v253
    %v334 = vunpack.c.h.b16 %v253
    %v335 = vunpack.c.l.b16 %v254
    %v336 = vunpack.c.h.b16 %v254
    %v337 = vunpack.c.l.b16 %v255
    %v338 = vunpack.c.h.b16 %v255
    %v339 = vunpack.c.l.b16 %v256
    %v340 = vunpack.c.h.b16 %v256
    %v341 = vunpack.c.l.b16 %v257
    %v342 = vunpack.c.h.b16 %v257
    %v343 = vunpack.c.l.b16 %v258
    %v344 = vunpack.c.h.b16 %v258
    %v345 = vunpack.c.l.b16 %v259
    %v346 = vunpack.c.h.b16 %v259
    %v347 = vunpack.c.l.b16 %v260
    %v348 = vunpack.c.h.b16 %v260
    %v349 = vunpack.c.l.b16 %v261
    %v350 = vunpack.c.h.b16 %v261
    %v351 = vunpack.c.l.b16 %v262
    %v352 = vunpack.c.h.b16 %v262
    %v353 = vunpack.c.l.b16 %v263
    %v354 = vunpack.c.h.b16 %v263
    %v355 = vunpack.c.l.b16 %v264
    %v356 = vunpack.c.h.b16 %v264
    %v357 = vunpack.c.l.b16 %v265
    %v358 = vunpack.c.h.b16 %v265
    %v359 = vunpack.c.l.b16 %v266
    %v360 = vunpack.c.h.b16 %v266
    %v361 = vunpack.c.l.b16 %v267
    %v362 = vunpack.c.h.b16 %v267
    %v363 = vunpack.c.l.b16 %v268
    %v364 = vunpack.c.h.b16 %v268
    %v365 = vunpack.c.l.b16 %v269
    %v366 = vunpack.c.h.b16 %v269
    %v367 = vunpack.c.l.b16 %v270
    %v368 = vunpack.c.h.b16 %v270
    %v369 = vunpack.c.l.b16 %v271
    %v370 = vunpack.c.h.b16 %v271
    %v371 = vunpack.c.l.b16 %v272
    %v372 = vunpack.c.h.b16 %v272
    %v373 = vunpack.c.l.b16 %v273
    %v374 = vunpack.c.h.b16 %v273
    %v375 = vunpack.c.l.b16 %v274
    %v376 = vunpack.c.h.b16 %v274
    %v377 = vunpack.c.l.b16 %v275
    %v378 = vunpack.c.h.b16 %v275
    %v379 = vunpack.c.l.b16 %v276
    %v380 = vunpack.c.h.b16 %v276
    %v381 = vunpack.c.l.b16 %v277
    %v382 = vunpack.c.h.b16 %v277
    %v383 = vunpack.c.l.b16 %v278
    %v384 = vunpack.c.h.b16 %v278
    %v385 = vunpack.c.l.b16 %v279
    %v386 = vunpack.c.h.b16 %v279
    %v387 = vunpack.c.l.b16 %v280
    %v388 = vunpack.c.h.b16 %v280
    %v389 = vpack.c.b16 %v327, %v325
    %v390 = vpack.c.b16 %v328, %v326
    %v391 = vpack.c.b16 %v331, %v329
    %v392 = vpack.c.b16 %v332, %v330
    %v393 = vpack.c.b16 %v335, %v333
    %v394 = vpack.c.b16 %v336, %v334
    %v395 = vpack.c.b16 %v339, %v337
    %v396 = vpack.c.b16 %v340, %v338
    %v397 = vpack.c.b16 %v343, %v341
    %v398 = vpack.c.b16 %v344, %v342
    %v399 = vpack.c.b16 %v347, %v345
    %v400 = vpack.c.b16 %v348, %v346
    %v401 = vpack.c.b16 %v351, %v349
    %v402 = vpack.c.b16 %v352, %v350
    %v403 = vpack.c.b16 %v355, %v353
    %v404 = vpack.c.b16 %v356, %v354
    %v405 = vpack.c.b16 %v359, %v357
    %v406 = vpack.c.b16 %v360, %v358
    %v407 = vpack.c.b16 %v363, %v361
    %v408 = vpack.c.b16 %v364, %v362
    %v409 = vpack.c.b16 %v367, %v365
    %v410 = vpack.c.b16 %v368, %v366
    %v411 = vpack.c.b16 %v371, %v369
    %v412 = vpack.c.b16 %v372, %v370
    %v413 = vpack.c.b16 %v375, %v373
    %v414 = vpack.c.b16 %v376, %v374
    %v415 = vpack.c.b16 %v379, %v377
    %v416 = vpack.c.b16 %v380, %v378
    %v417 = vpack.c.b16 %v383, %v381
    %v418 = vpack.c.b16 %v384, %v382
    %v419 = vpack.c.b16 %v387, %v385
    %v420 = vpack.c.b16 %v388, %v386
    %453 = vmatprep.subr.bf16.mxu0 %v404
    %454 = vmatpush1.bf16.msra.mxu0 %v403
    %455 = vmatprep.subr.bf16.mxu0 %v402
    %456 = vmatpush1.bf16.msra.mxu0 %v401
    %457 = vmatprep.subr.bf16.mxu0 %v400
    %458 = vmatpush1.bf16.msra.mxu0 %v399
    %459 = vmatprep.subr.bf16.mxu0 %v398
    %460 = vmatpush1.bf16.msra.mxu0 %v397
    %461 = vmatprep.subr.bf16.mxu0 %v396
    %462 = vmatpush1.bf16.msra.mxu0 %v395
    %463 = vmatprep.subr.bf16.mxu0 %v394
    %464 = vmatpush1.bf16.msra.mxu0 %v393
    %465 = vmatprep.subr.bf16.mxu0 %v392
    %466 = vmatpush1.bf16.msra.mxu0 %v391
    %467 = vmatprep.subr.bf16.mxu0 %v390
    %468 = vmatpush1.bf16.msra.mxu0 %v389
    %469 = vmatprep.subr.bf16.mxu0 %v420
    %470 = vmatpush2.bf16.msra.mxu0 %v419
    %471 = vmatprep.subr.bf16.mxu0 %v418
    %472 = vmatpush2.bf16.msra.mxu0 %v417
    %473 = vmatprep.subr.bf16.mxu0 %v416
    %474 = vmatpush2.bf16.msra.mxu0 %v415
    %475 = vmatprep.subr.bf16.mxu0 %v414
    %476 = vmatpush2.bf16.msra.mxu0 %v413
    %477 = vmatprep.subr.bf16.mxu0 %v412
    %478 = vmatpush2.bf16.msra.mxu0 %v411
    %479 = vmatprep.subr.bf16.mxu0 %v410
    %480 = vmatpush2.bf16.msra.mxu0 %v409
    %481 = vmatprep.subr.bf16.mxu0 %v408
    %482 = vmatpush2.bf16.msra.mxu0 %v407
    %483 = vmatprep.subr.bf16.mxu0 %v406
    %484 = vmatpush2.bf16.msra.mxu0 %v405
    %485 = vmatprep.mubr.bf16.mxu0 %v242
    %486 = vmatmul.mubr.bf16.gmra.mxu0 %v241
    %v487 = vpop.f32.mrf.mxu0
    %v488 = vadd.f32 %v286, %v487
    %v489 = vpop.f32.mrf.mxu0
    %v490 = vadd.f32 %v290, %v489
    %v491 = vpop.f32.mrf.mxu0
    %v492 = vadd.f32 %v286, %v491
    %v493 = vpop.f32.mrf.mxu0
    %v494 = vadd.f32 %v290, %v493
    %495 = vmatprep.mubr.bf16.mxu0 %v244
    %496 = vmatmul.mubr.bf16.gmra.mxu0 %v243
    %v497 = vpop.f32.mrf.mxu0
    %v498 = vadd.f32 %v286, %v497
    %v499 = vpop.f32.mrf.mxu0
    %v500 = vadd.f32 %v290, %v499
    %v501 = vpop.f32.mrf.mxu0
    %v502 = vadd.f32 %v286, %v501
    %v503 = vpop.f32.mrf.mxu0
    %v504 = vadd.f32 %v290, %v503
    %505 = vmatprep.mubr.bf16.mxu0 %v246
    %506 = vmatmul.mubr.bf16.gmra.mxu0 %v245
    %v507 = vpop.f32.mrf.mxu0
    %v508 = vadd.f32 %v286, %v507
    %v509 = vpop.f32.mrf.mxu0
    %v510 = vadd.f32 %v290, %v509
    %v511 = vpop.f32.mrf.mxu0
    %v512 = vadd.f32 %v286, %v511
    %v513 = vpop.f32.mrf.mxu0
    %v514 = vadd.f32 %v290, %v513
    %515 = vmatprep.mubr.bf16.mxu0 %v248
    %516 = vmatmul.mubr.bf16.gmra.mxu0 %v247
    %v517 = vpop.f32.mrf.mxu0
    %v518 = vadd.f32 %v286, %v517
    %v519 = vpop.f32.mrf.mxu0
    %v520 = vadd.f32 %v290, %v519
    %v521 = vpop.f32.mrf.mxu0
    %v522 = vadd.f32 %v286, %v521
    %v523 = vpop.f32.mrf.mxu0
    %v524 = vadd.f32 %v290, %v523
    %525 = vdwg.mxu0
    %v526 = vmax.f32 %v488, 0.0
    %v527 = vmax.f32 %v490, 0.0
    %v528 = vmax.f32 %v492, 0.0
    %v529 = vmax.f32 %v494, 0.0
    %v530 = vmax.f32 %v498, 0.0
    %v531 = vmax.f32 %v500, 0.0
    %v532 = vmax.f32 %v502, 0.0
    %v533 = vmax.f32 %v504, 0.0
    %v534 = vmax.f32 %v508, 0.0
    %v535 = vmax.f32 %v510, 0.0
    %v536 = vmax.f32 %v512, 0.0
    %v537 = vmax.f32 %v514, 0.0
    %v538 = vmax.f32 %v518, 0.0
    %v539 = vmax.f32 %v520, 0.0
    %v540 = vmax.f32 %v522, 0.0
    %v541 = vmax.f32 %v524, 0.0
    %v542 = vpack.c.bf16 %v528, %v526
    %v543 = vpack.c.bf16 %v529, %v527
    %v544 = vpack.c.bf16 %v532, %v530
    %v545 = vpack.c.bf16 %v533, %v531
    %v546 = vpack.c.bf16 %v536, %v534
    %v547 = vpack.c.bf16 %v537, %v535
    %v548 = vpack.c.bf16 %v540, %v538
    %v549 = vpack.c.bf16 %v541, %v539
    %v550 = vld [vmem:[#allocation5] sm:$0xff]
    %v551 = vld [vmem:[#allocation5 + $0x8] sm:$0xff]
    %v552 = vld [vmem:[#allocation5 + $0x10] sm:$0xff]
    %v553 = vld [vmem:[#allocation5 + $0x18] sm:$0xff]
    %v554 = vld [vmem:[#allocation5 + $0x20] sm:$0xff]
    %v555 = vld [vmem:[#allocation5 + $0x28] sm:$0xff]
    %v556 = vld [vmem:[#allocation5 + $0x30] sm:$0xff]
    %v557 = vld [vmem:[#allocation5 + $0x38] sm:$0xff]
    %v558 = vld [vmem:[#allocation5 + $0x40] sm:$0xff]
    %v559 = vld [vmem:[#allocation5 + $0x48] sm:$0xff]
    %v560 = vld [vmem:[#allocation5 + $0x50] sm:$0xff]
    %v561 = vld [vmem:[#allocation5 + $0x58] sm:$0xff]
    %v562 = vld [vmem:[#allocation5 + $0x60] sm:$0xff]
    %v563 = vld [vmem:[#allocation5 + $0x68] sm:$0xff]
    %v564 = vld [vmem:[#allocation5 + $0x70] sm:$0xff]
    %v565 = vld [vmem:[#allocation5 + $0x78] sm:$0xff]
    %v566 = vld [vmem:[#allocation5 + $0x80] sm:$0xff]
    %v567 = vld [vmem:[#allocation5 + $0x88] sm:$0xff]
    %v568 = vld [vmem:[#allocation5 + $0x90] sm:$0xff]
    %v569 = vld [vmem:[#allocation5 + $0x98] sm:$0xff]
    %v570 = vld [vmem:[#allocation5 + $0xa0] sm:$0xff]
    %v571 = vld [vmem:[#allocation5 + $0xa8] sm:$0xff]
    %v572 = vld [vmem:[#allocation5 + $0xb0] sm:$0xff]
    %v573 = vld [vmem:[#allocation5 + $0xb8] sm:$0xff]
    %v574 = vld [vmem:[#allocation5 + $0xc0] sm:$0xff]
    %v575 = vld [vmem:[#allocation5 + $0xc8] sm:$0xff]
    %v576 = vld [vmem:[#allocation5 + $0xd0] sm:$0xff]
    %v577 = vld [vmem:[#allocation5 + $0xd8] sm:$0xff]
    %v578 = vld [vmem:[#allocation5 + $0xe0] sm:$0xff]
    %v579 = vld [vmem:[#allocation5 + $0xe8] sm:$0xff]
    %v580 = vld [vmem:[#allocation5 + $0xf0] sm:$0xff]
    %v581 = vld [vmem:[#allocation5 + $0xf8] sm:$0xff]
    %v582 = vld [vmem:[#allocation5 + $0x100] sm:$0xff]
    %v583 = vld [vmem:[#allocation5 + $0x108] sm:$0xff]
    %v584 = vld [vmem:[#allocation5 + $0x110] sm:$0xff]
    %v585 = vld [vmem:[#allocation5 + $0x118] sm:$0xff]
    %v586 = vld [vmem:[#allocation5 + $0x120] sm:$0xff]
    %v587 = vld [vmem:[#allocation5 + $0x128] sm:$0xff]
    %v588 = vld [vmem:[#allocation5 + $0x130] sm:$0xff]
    %v589 = vld [vmem:[#allocation5 + $0x138] sm:$0xff]
    %v590 = vld [vmem:[#allocation5 + $0x140] sm:$0xff]
    %v591 = vld [vmem:[#allocation5 + $0x148] sm:$0xff]
    %v592 = vld [vmem:[#allocation5 + $0x150] sm:$0xff]
    %v593 = vld [vmem:[#allocation5 + $0x158] sm:$0xff]
    %v594 = vld [vmem:[#allocation5 + $0x160] sm:$0xff]
    %v595 = vld [vmem:[#allocation5 + $0x168] sm:$0xff]
    %v596 = vld [vmem:[#allocation5 + $0x170] sm:$0xff]
    %v597 = vld [vmem:[#allocation5 + $0x178] sm:$0xff]
    %v598 = vld [vmem:[#allocation5 + $0x180] sm:$0xff]
    %v599 = vld [vmem:[#allocation5 + $0x188] sm:$0xff]
    %v600 = vld [vmem:[#allocation5 + $0x190] sm:$0xff]
    %v601 = vld [vmem:[#allocation5 + $0x198] sm:$0xff]
    %v602 = vld [vmem:[#allocation5 + $0x1a0] sm:$0xff]
    %v603 = vld [vmem:[#allocation5 + $0x1a8] sm:$0xff]
    %v604 = vld [vmem:[#allocation5 + $0x1b0] sm:$0xff]
    %v605 = vld [vmem:[#allocation5 + $0x1b8] sm:$0xff]
    %v606 = vld [vmem:[#allocation5 + $0x1c0] sm:$0xff]
    %v607 = vld [vmem:[#allocation5 + $0x1c8] sm:$0xff]
    %v608 = vld [vmem:[#allocation5 + $0x1d0] sm:$0xff]
    %v609 = vld [vmem:[#allocation5 + $0x1d8] sm:$0xff]
    %v610 = vld [vmem:[#allocation5 + $0x1e0] sm:$0xff]
    %v611 = vld [vmem:[#allocation5 + $0x1e8] sm:$0xff]
    %v612 = vld [vmem:[#allocation5 + $0x1f0] sm:$0xff]
    %v613 = vld [vmem:[#allocation5 + $0x1f8] sm:$0xff]
    %v614 = vld [vmem:[%s6] sm:$0xf]
    %v616 = vlaneseq
    %v617 = vshrl.u32 %v616, 7
    %v618 = vsub.s32 0, %v617
    %v619 = vrot.slane %v614, %v618
    %v620 = vlaneseq
    %v621 = vshrl.u32 %v620, 7
    %v622 = vsub.s32 1, %v621
    %v623 = vrot.slane %v614, %v622
    %v624 = vlaneseq
    %v625 = vshrl.u32 %v624, 7
    %v626 = vsub.s32 2, %v625
    %v627 = vrot.slane %v614, %v626
    %v628 = vlaneseq
    %v629 = vshrl.u32 %v628, 7
    %v630 = vsub.s32 3, %v629
    %v631 = vrot.slane %v614, %v630
    %v700 = vunpack.c.l.b16 %v550
    %v701 = vunpack.c.h.b16 %v550
    %v702 = vunpack.c.l.b16 %v551
    %v703 = vunpack.c.h.b16 %v551
    %v704 = vunpack.c.l.b16 %v552
    %v705 = vunpack.c.h.b16 %v552
    %v706 = vunpack.c.l.b16 %v553
    %v707 = vunpack.c.h.b16 %v553
    %v708 = vunpack.c.l.b16 %v554
    %v709 = vunpack.c.h.b16 %v554
    %v710 = vunpack.c.l.b16 %v555
    %v711 = vunpack.c.h.b16 %v555
    %v712 = vunpack.c.l.b16 %v556
    %v713 = vunpack.c.h.b16 %v556
    %v714 = vunpack.c.l.b16 %v557
    %v715 = vunpack.c.h.b16 %v557
    %v716 = vunpack.c.l.b16 %v558
    %v717 = vunpack.c.h.b16 %v558
    %v718 = vunpack.c.l.b16 %v559
    %v719 = vunpack.c.h.b16 %v559
    %v720 = vunpack.c.l.b16 %v560
    %v721 = vunpack.c.h.b16 %v560
    %v722 = vunpack.c.l.b16 %v561
    %v723 = vunpack.c.h.b16 %v561
    %v724 = vunpack.c.l.b16 %v562
    %v725 = vunpack.c.h.b16 %v562
    %v726 = vunpack.c.l.b16 %v563
    %v727 = vunpack.c.h.b16 %v563
    %v728 = vunpack.c.l.b16 %v564
    %v729 = vunpack.c.h.b16 %v564
    %v730 = vunpack.c.l.b16 %v565
    %v731 = vunpack.c.h.b16 %v565
    %v732 = vunpack.c.l.b16 %v566
    %v733 = vunpack.c.h.b16 %v566
    %v734 = vunpack.c.l.b16 %v567
    %v735 = vunpack.c.h.b16 %v567
    %v736 = vunpack.c.l.b16 %v568
    %v737 = vunpack.c.h.b16 %v568
    %v738 = vunpack.c.l.b16 %v569
    %v739 = vunpack.c.h.b16 %v569
    %v740 = vunpack.c.l.b16 %v570
    %v741 = vunpack.c.h.b16 %v570
    %v742 = vunpack.c.l.b16 %v571
    %v743 = vunpack.c.h.b16 %v571
    %v744 = vunpack.c.l.b16 %v572
    %v745 = vunpack.c.h.b16 %v572
    %v746 = vunpack.c.l.b16 %v573
    %v747 = vunpack.c.h.b16 %v573
    %v748 = vunpack.c.l.b16 %v574
    %v749 = vunpack.c.h.b16 %v574
    %v750 = vunpack.c.l.b16 %v575
    %v751 = vunpack.c.h.b16 %v575
    %v752 = vunpack.c.l.b16 %v576
    %v753 = vunpack.c.h.b16 %v576
    %v754 = vunpack.c.l.b16 %v577
    %v755 = vunpack.c.h.b16 %v577
    %v756 = vunpack.c.l.b16 %v578
    %v757 = vunpack.c.h.b16 %v578
    %v758 = vunpack.c.l.b16 %v579
    %v759 = vunpack.c.h.b16 %v579
    %v760 = vunpack.c.l.b16 %v580
    %v761 = vunpack.c.h.b16 %v580
    %v762 = vunpack.c.l.b16 %v581
    %v763 = vunpack.c.h.b16 %v581
    %v764 = vunpack.c.l.b16 %v582
    %v765 = vunpack.c.h.b16 %v582
    %v766 = vunpack.c.l.b16 %v583
    %v767 = vunpack.c.h.b16 %v583
    %v768 = vunpack.c.l.b16 %v584
    %v769 = vunpack.c.h.b16 %v584
    %v770 = vunpack.c.l.b16 %v585
    %v771 = vunpack.c.h.b16 %v585
    %v772 = vunpack.c.l.b16 %v586
    %v773 = vunpack.c.h.b16 %v586
    %v774 = vunpack.c.l.b16 %v587
    %v775 = vunpack.c.h.b16 %v587
    %v776 = vunpack.c.l.b16 %v588
    %v777 = vunpack.c.h.b16 %v588
    %v778 = vunpack.c.l.b16 %v589
    %v779 = vunpack.c.h.b16 %v589
    %v780 = vunpack.c.l.b16 %v590
    %v781 = vunpack.c.h.b16 %v590
    %v782 = vunpack.c.l.b16 %v591
    %v783 = vunpack.c.h.b16 %v591
    %v784 = vunpack.c.l.b16 %v592
    %v785 = vunpack.c.h.b16 %v592
    %v786 = vunpack.c.l.b16 %v593
    %v787 = vunpack.c.h.b16 %v593
    %v788 = vunpack.c.l.b16 %v594
    %v789 = vunpack.c.h.b16 %v594
    %v790 = vunpack.c.l.b16 %v595
    %v791 = vunpack.c.h.b16 %v595
    %v792 = vunpack.c.l.b16 %v596
    %v793 = vunpack.c.h.b16 %v596
    %v794 = vunpack.c.l.b16 %v597
    %v795 = vunpack.c.h.b16 %v597
    %v796 = vunpack.c.l.b16 %v598
    %v797 = vunpack.c.h.b16 %v598
    %v798 = vunpack.c.l.b16 %v599
    %v799 = vunpack.c.h.b16 %v599
    %v800 = vunpack.c.l.b16 %v600
    %v801 = vunpack.c.h.b16 %v600
    %v802 = vunpack.c.l.b16 %v601
    %v803 = vunpack.c.h.b16 %v601
    %v804 = vunpack.c.l.b16 %v602
    %v805 = vunpack.c.h.b16 %v602
    %v806 = vunpack.c.l.b16 %v603
    %v807 = vunpack.c.h.b16 %v603
    %v808 = vunpack.c.l.b16 %v604
    %v809 = vunpack.c.h.b16 %v604
    %v810 = vunpack.c.l.b16 %v605
    %v811 = vunpack.c.h.b16 %v605
    %v812 = vunpack.c.l.b16 %v606
    %v813 = vunpack.c.h.b16 %v606
    %v814 = vunpack.c.l.b16 %v607
    %v815 = vunpack.c.h.b16 %v607
    %v816 = vunpack.c.l.b16 %v608
    %v817 = vunpack.c.h.b16 %v608
    %v818 = vunpack.c.l.b16 %v609
    %v819 = vunpack.c.h.b16 %v609
    %v820 = vunpack.c.l.b16 %v610
    %v821 = vunpack.c.h.b16 %v610
    %v822 = vunpack.c.l.b16 %v611
    %v823 = vunpack.c.h.b16 %v611
    %v824 = vunpack.c.l.b16 %v612
    %v825 = vunpack.c.h.b16 %v612
    %v826 = vunpack.c.l.b16 %v613
    %v827 = vunpack.c.h.b16 %v613
    %v828 = vpack.c.b16 %v704, %v700
    %v829 = vpack.c.b16 %v705, %v701
    %v830 = vpack.c.b16 %v706, %v702
    %v831 = vpack.c.b16 %v707, %v703
    %v832 = vpack.c.b16 %v712, %v708
    %v833 = vpack.c.b16 %v713, %v709
    %v834 = vpack.c.b16 %v714, %v710
    %v835 = vpack.c.b16 %v715, %v711
    %v836 = vpack.c.b16 %v720, %v716
    %v837 = vpack.c.b16 %v721, %v717
    %v838 = vpack.c.b16 %v722, %v718
    %v839 = vpack.c.b16 %v723, %v719
    %v840 = vpack.c.b16 %v728, %v724
    %v841 = vpack.c.b16 %v729, %v725
    %v842 = vpack.c.b16 %v730, %v726
    %v843 = vpack.c.b16 %v731, %v727
    %v844 = vpack.c.b16 %v736, %v732
    %v845 = vpack.c.b16 %v737, %v733
    %v846 = vpack.c.b16 %v738, %v734
    %v847 = vpack.c.b16 %v739, %v735
    %v848 = vpack.c.b16 %v744, %v740
    %v849 = vpack.c.b16 %v745, %v741
    %v850 = vpack.c.b16 %v746, %v742
    %v851 = vpack.c.b16 %v747, %v743
    %v852 = vpack.c.b16 %v752, %v748
    %v853 = vpack.c.b16 %v753, %v749
    %v854 = vpack.c.b16 %v754, %v750
    %v855 = vpack.c.b16 %v755, %v751
    %v856 = vpack.c.b16 %v760, %v756
    %v857 = vpack.c.b16 %v761, %v757
    %v858 = vpack.c.b16 %v762, %v758
    %v859 = vpack.c.b16 %v763, %v759
    %v860 = vpack.c.b16 %v768, %v764
    %v861 = vpack.c.b16 %v769, %v765
    %v862 = vpack.c.b16 %v770, %v766
    %v863 = vpack.c.b16 %v771, %v767
    %v864 = vpack.c.b16 %v776, %v772
    %v865 = vpack.c.b16 %v777, %v773
    %v866 = vpack.c.b16 %v778, %v774
    %v867 = vpack.c.b16 %v779, %v775
    %v868 = vpack.c.b16 %v784, %v780
    %v869 = vpack.c.b16 %v785, %v781
    %v870 = vpack.c.b16 %v786, %v782
    %v871 = vpack.c.b16 %v787, %v783
    %v872 = vpack.c.b16 %v792, %v788
    %v873 = vpack.c.b16 %v793, %v789
    %v874 = vpack.c.b16 %v794, %v790
    %v875 = vpack.c.b16 %v795, %v791
    %v876 = vpack.c.b16 %v800, %v796
    %v877 = vpack.c.b16 %v801, %v797
    %v878 = vpack.c.b16 %v802, %v798
    %v879 = vpack.c.b16 %v803, %v799
    %v880 = vpack.c.b16 %v808, %v804
    %v881 = vpack.c.b16 %v809, %v805
    %v882 = vpack.c.b16 %v810, %v806
    %v883 = vpack.c.b16 %v811, %v807
    %v884 = vpack.c.b16 %v816, %v812
    %v885 = vpack.c.b16 %v817, %v813
    %v886 = vpack.c.b16 %v818, %v814
    %v887 = vpack.c.b16 %v819, %v815
    %v888 = vpack.c.b16 %v824, %v820
    %v889 = vpack.c.b16 %v825, %v821
    %v890 = vpack.c.b16 %v826, %v822
    %v891 = vpack.c.b16 %v827, %v823
    %956 = vmatprep.subr.bf16.mxu0 %v857
    %957 = vmatpush1.bf16.msra.mxu0 %v856
    %958 = vmatprep.subr.bf16.mxu0 %v853
    %959 = vmatpush1.bf16.msra.mxu0 %v852
    %960 = vmatprep.subr.bf16.mxu0 %v849
    %961 = vmatpush1.bf16.msra.mxu0 %v848
    %962 = vmatprep.subr.bf16.mxu0 %v845
    %963 = vmatpush1.bf16.msra.mxu0 %v844
    %964 = vmatprep.subr.bf16.mxu0 %v841
    %965 = vmatpush1.bf16.msra.mxu0 %v840
    %966 = vmatprep.subr.bf16.mxu0 %v837
    %967 = vmatpush1.bf16.msra.mxu0 %v836
    %968 = vmatprep.subr.bf16.mxu0 %v833
    %969 = vmatpush1.bf16.msra.mxu0 %v832
    %970 = vmatprep.subr.bf16.mxu0 %v829
    %971 = vmatpush1.bf16.msra.mxu0 %v828
    %972 = vmatprep.subr.bf16.mxu0 %v889
    %973 = vmatpush2.bf16.msra.mxu0 %v888
    %974 = vmatprep.subr.bf16.mxu0 %v885
    %975 = vmatpush2.bf16.msra.mxu0 %v884
    %976 = vmatprep.subr.bf16.mxu0 %v881
    %977 = vmatpush2.bf16.msra.mxu0 %v880
    %978 = vmatprep.subr.bf16.mxu0 %v877
    %979 = vmatpush2.bf16.msra.mxu0 %v876
    %980 = vmatprep.subr.bf16.mxu0 %v873
    %981 = vmatpush2.bf16.msra.mxu0 %v872
    %982 = vmatprep.subr.bf16.mxu0 %v869
    %983 = vmatpush2.bf16.msra.mxu0 %v868
    %984 = vmatprep.subr.bf16.mxu0 %v865
    %985 = vmatpush2.bf16.msra.mxu0 %v864
    %986 = vmatprep.subr.bf16.mxu0 %v861
    %987 = vmatpush2.bf16.msra.mxu0 %v860
    %988 = vmatprep.mubr.bf16.mxu0 %v543
    %989 = vmatmul.mubr.bf16.gmra.mxu0 %v542
    %v990 = vpop.f32.mrf.mxu0
    %v991 = vadd.f32 %v619, %v990
    %v992 = vpop.f32.mrf.mxu0
    %v993 = vadd.f32 %v623, %v992
    %v994 = vpop.f32.mrf.mxu0
    %v995 = vadd.f32 %v619, %v994
    %v996 = vpop.f32.mrf.mxu0
    %v997 = vadd.f32 %v623, %v996
    %998 = vmatprep.mubr.bf16.mxu0 %v545
    %999 = vmatmul.mubr.bf16.gmra.mxu0 %v544
    %v1000 = vpop.f32.mrf.mxu0
    %v1001 = vadd.f32 %v619, %v1000
    %v1002 = vpop.f32.mrf.mxu0
    %v1003 = vadd.f32 %v623, %v1002
    %v1004 = vpop.f32.mrf.mxu0
    %v1005 = vadd.f32 %v619, %v1004
    %v1006 = vpop.f32.mrf.mxu0
    %v1007 = vadd.f32 %v623, %v1006
    %1008 = vmatprep.mubr.bf16.mxu0 %v547
    %1009 = vmatmul.mubr.bf16.gmra.mxu0 %v546
    %v1010 = vpop.f32.mrf.mxu0
    %v1011 = vadd.f32 %v619, %v1010
    %v1012 = vpop.f32.mrf.mxu0
    %v1013 = vadd.f32 %v623, %v1012
    %v1014 = vpop.f32.mrf.mxu0
    %v1015 = vadd.f32 %v619, %v1014
    %v1016 = vpop.f32.mrf.mxu0
    %v1017 = vadd.f32 %v623, %v1016
    %1018 = vmatprep.mubr.bf16.mxu0 %v549
    %1019 = vmatmul.mubr.bf16.gmra.mxu0 %v548
    %v1020 = vpop.f32.mrf.mxu0
    %v1021 = vadd.f32 %v619, %v1020
    %v1022 = vpop.f32.mrf.mxu0
    %v1023 = vadd.f32 %v623, %v1022
    %v1024 = vpop.f32.mrf.mxu0
    %v1025 = vadd.f32 %v619, %v1024
    %v1026 = vpop.f32.mrf.mxu0
    %v1027 = vadd.f32 %v623, %v1026
    %1028 = vdwg.mxu0
    %1029 = vmatprep.subr.bf16.mxu0 %v859
    %1030 = vmatpush1.bf16.msra.mxu0 %v858
    %1031 = vmatprep.subr.bf16.mxu0 %v855
    %1032 = vmatpush1.bf16.msra.mxu0 %v854
    %1033 = vmatprep.subr.bf16.mxu0 %v851
    %1034 = vmatpush1.bf16.msra.mxu0 %v850
    %1035 = vmatprep.subr.bf16.mxu0 %v847
    %1036 = vmatpush1.bf16.msra.mxu0 %v846
    %1037 = vmatprep.subr.bf16.mxu0 %v843
    %1038 = vmatpush1.bf16.msra.mxu0 %v842
    %1039 = vmatprep.subr.bf16.mxu0 %v839
    %1040 = vmatpush1.bf16.msra.mxu0 %v838
    %1041 = vmatprep.subr.bf16.mxu0 %v835
    %1042 = vmatpush1.bf16.msra.mxu0 %v834
    %1043 = vmatprep.subr.bf16.mxu0 %v831
    %1044 = vmatpush1.bf16.msra.mxu0 %v830
    %1045 = vmatprep.subr.bf16.mxu0 %v891
    %1046 = vmatpush2.bf16.msra.mxu0 %v890
    %1047 = vmatprep.subr.bf16.mxu0 %v887
    %1048 = vmatpush2.bf16.msra.mxu0 %v886
    %1049 = vmatprep.subr.bf16.mxu0 %v883
    %1050 = vmatpush2.bf16.msra.mxu0 %v882
    %1051 = vmatprep.subr.bf16.mxu0 %v879
    %1052 = vmatpush2.bf16.msra.mxu0 %v878
    %1053 = vmatprep.subr.bf16.mxu0 %v875
    %1054 = vmatpush2.bf16.msra.mxu0 %v874
    %1055 = vmatprep.subr.bf16.mxu0 %v871
    %1056 = vmatpush2.bf16.msra.mxu0 %v870
    %1057 = vmatprep.subr.bf16.mxu0 %v867
    %1058 = vmatpush2.bf16.msra.mxu0 %v866
    %1059 = vmatprep.subr.bf16.mxu0 %v863
    %1060 = vmatpush2.bf16.msra.mxu0 %v862
    %1061 = vmatprep.mubr.bf16.mxu0 %v543
    %1062 = vmatmul.mubr.bf16.gmra.mxu0 %v542
    %v1063 = vpop.f32.mrf.mxu0
    %v1064 = vadd.f32 %v627, %v1063
    %v1065 = vpop.f32.mrf.mxu0
    %v1066 = vadd.f32 %v631, %v1065
    %v1067 = vpop.f32.mrf.mxu0
    %v1068 = vadd.f32 %v627, %v1067
    %v1069 = vpop.f32.mrf.mxu0
    %v1070 = vadd.f32 %v631, %v1069
    %1071 = vmatprep.mubr.bf16.mxu0 %v545
    %1072 = vmatmul.mubr.bf16.gmra.mxu0 %v544
    %v1073 = vpop.f32.mrf.mxu0
    %v1074 = vadd.f32 %v627, %v1073
    %v1075 = vpop.f32.mrf.mxu0
    %v1076 = vadd.f32 %v631, %v1075
    %v1077 = vpop.f32.mrf.mxu0
    %v1078 = vadd.f32 %v627, %v1077
    %v1079 = vpop.f32.mrf.mxu0
    %v1080 = vadd.f32 %v631, %v1079
    %1081 = vmatprep.mubr.bf16.mxu0 %v547
    %1082 = vmatmul.mubr.bf16.gmra.mxu0 %v546
    %v1083 = vpop.f32.mrf.mxu0
    %v1084 = vadd.f32 %v627, %v1083
    %v1085 = vpop.f32.mrf.mxu0
    %v1086 = vadd.f32 %v631, %v1085
    %v1087 = vpop.f32.mrf.mxu0
    %v1088 = vadd.f32 %v627, %v1087
    %v1089 = vpop.f32.mrf.mxu0
    %v1090 = vadd.f32 %v631, %v1089
    %1091 = vmatprep.mubr.bf16.mxu0 %v549
    %1092 = vmatmul.mubr.bf16.gmra.mxu0 %v548
    %v1093 = vpop.f32.mrf.mxu0
    %v1094 = vadd.f32 %v627, %v1093
    %v1095 = vpop.f32.mrf.mxu0
    %v1096 = vadd.f32 %v631, %v1095
    %v1097 = vpop.f32.mrf.mxu0
    %v1098 = vadd.f32 %v627, %v1097
    %v1099 = vpop.f32.mrf.mxu0
    %v1100 = vadd.f32 %v631, %v1099
    %1101 = vdwg.mxu0
    %v1102 = vmax.f32 %v991, 0.0
    %v1103 = vmax.f32 %v993, 0.0
    %v1104 = vmax.f32 %v1064, 0.0
    %v1105 = vmax.f32 %v1066, 0.0
    %v1106 = vmax.f32 %v995, 0.0
    %v1107 = vmax.f32 %v997, 0.0
    %v1108 = vmax.f32 %v1068, 0.0
    %v1109 = vmax.f32 %v1070, 0.0
    %v1110 = vmax.f32 %v1001, 0.0
    %v1111 = vmax.f32 %v1003, 0.0
    %v1112 = vmax.f32 %v1074, 0.0
    %v1113 = vmax.f32 %v1076, 0.0
    %v1114 = vmax.f32 %v1005, 0.0
    %v1115 = vmax.f32 %v1007, 0.0
    %v1116 = vmax.f32 %v1078, 0.0
    %v1117 = vmax.f32 %v1080, 0.0
    %v1118 = vmax.f32 %v1011, 0.0
    %v1119 = vmax.f32 %v1013, 0.0
    %v1120 = vmax.f32 %v1084, 0.0
    %v1121 = vmax.f32 %v1086, 0.0
    %v1122 = vmax.f32 %v1015, 0.0
    %v1123 = vmax.f32 %v1017, 0.0
    %v1124 = vmax.f32 %v1088, 0.0
    %v1125 = vmax.f32 %v1090, 0.0
    %v1126 = vmax.f32 %v1021, 0.0
    %v1127 = vmax.f32 %v1023, 0.0
    %v1128 = vmax.f32 %v1094, 0.0
    %v1129 = vmax.f32 %v1096, 0.0
    %v1130 = vmax.f32 %v1025, 0.0
    %v1131 = vmax.f32 %v1027, 0.0
    %v1132 = vmax.f32 %v1098, 0.0
    %v1133 = vmax.f32 %v1100, 0.0
    %v1134 = vpack.c.bf16 %v1106, %v1102
    %v1135 = vpack.c.bf16 %v1107, %v1103
    %v1136 = vpack.c.bf16 %v1108, %v1104
    %v1137 = vpack.c.bf16 %v1109, %v1105
    %v1138 = vpack.c.bf16 %v1114, %v1110
    %v1139 = vpack.c.bf16 %v1115, %v1111
    %v1140 = vpack.c.bf16 %v1116, %v1112
    %v1141 = vpack.c.bf16 %v1117, %v1113
    %v1142 = vpack.c.bf16 %v1122, %v1118
    %v1143 = vpack.c.bf16 %v1123, %v1119
    %v1144 = vpack.c.bf16 %v1124, %v1120
    %v1145 = vpack.c.bf16 %v1125, %v1121
    %v1146 = vpack.c.bf16 %v1130, %v1126
    %v1147 = vpack.c.bf16 %v1131, %v1127
    %v1148 = vpack.c.bf16 %v1132, %v1128
    %v1149 = vpack.c.bf16 %v1133, %v1129
    %v1150 = vld [vmem:[#allocation7] sm:$0xf]
    %v1151 = vld [vmem:[#allocation7 + $0x4] sm:$0xf]
    %v1152 = vld [vmem:[#allocation7 + $0x8] sm:$0xf]
    %v1153 = vld [vmem:[#allocation7 + $0xc] sm:$0xf]
    %v1154 = vld [vmem:[#allocation7 + $0x10] sm:$0xf]
    %v1155 = vld [vmem:[#allocation7 + $0x14] sm:$0xf]
    %v1156 = vld [vmem:[#allocation7 + $0x18] sm:$0xf]
    %v1157 = vld [vmem:[#allocation7 + $0x1c] sm:$0xf]
    %v1158 = vld [vmem:[#allocation7 + $0x20] sm:$0xf]
    %v1159 = vld [vmem:[#allocation7 + $0x24] sm:$0xf]
    %v1160 = vld [vmem:[#allocation7 + $0x28] sm:$0xf]
    %v1161 = vld [vmem:[#allocation7 + $0x2c] sm:$0xf]
    %v1162 = vld [vmem:[#allocation7 + $0x30] sm:$0xf]
    %v1163 = vld [vmem:[#allocation7 + $0x34] sm:$0xf]
    %v1164 = vld [vmem:[#allocation7 + $0x38] sm:$0xf]
    %v1165 = vld [vmem:[#allocation7 + $0x3c] sm:$0xf]
    %v1166 = vld [vmem:[#allocation7 + $0x40] sm:$0xf]
    %v1167 = vld [vmem:[#allocation7 + $0x44] sm:$0xf]
    %v1168 = vld [vmem:[#allocation7 + $0x48] sm:$0xf]
    %v1169 = vld [vmem:[#allocation7 + $0x4c] sm:$0xf]
    %v1170 = vld [vmem:[#allocation7 + $0x50] sm:$0xf]
    %v1171 = vld [vmem:[#allocation7 + $0x54] sm:$0xf]
    %v1172 = vld [vmem:[#allocation7 + $0x58] sm:$0xf]
    %v1173 = vld [vmem:[#allocation7 + $0x5c] sm:$0xf]
    %v1174 = vld [vmem:[#allocation7 + $0x60] sm:$0xf]
    %v1175 = vld [vmem:[#allocation7 + $0x64] sm:$0xf]
    %v1176 = vld [vmem:[#allocation7 + $0x68] sm:$0xf]
    %v1177 = vld [vmem:[#allocation7 + $0x6c] sm:$0xf]
    %v1178 = vld [vmem:[#allocation7 + $0x70] sm:$0xf]
    %v1179 = vld [vmem:[#allocation7 + $0x74] sm:$0xf]
    %v1180 = vld [vmem:[#allocation7 + $0x78] sm:$0xf]
    %v1181 = vld [vmem:[#allocation7 + $0x7c] sm:$0xf]
    %v1182 = vld [vmem:[#allocation7 + $0x80] sm:$0xf]
    %v1183 = vld [vmem:[#allocation7 + $0x84] sm:$0xf]
    %v1184 = vld [vmem:[#allocation7 + $0x88] sm:$0xf]
    %v1185 = vld [vmem:[#allocation7 + $0x8c] sm:$0xf]
    %v1186 = vld [vmem:[#allocation7 + $0x90] sm:$0xf]
    %v1187 = vld [vmem:[#allocation7 + $0x94] sm:$0xf]
    %v1188 = vld [vmem:[#allocation7 + $0x98] sm:$0xf]
    %v1189 = vld [vmem:[#allocation7 + $0x9c] sm:$0xf]
    %v1190 = vld [vmem:[#allocation7 + $0xa0] sm:$0xf]
    %v1191 = vld [vmem:[#allocation7 + $0xa4] sm:$0xf]
    %v1192 = vld [vmem:[#allocation7 + $0xa8] sm:$0xf]
    %v1193 = vld [vmem:[#allocation7 + $0xac] sm:$0xf]
    %v1194 = vld [vmem:[#allocation7 + $0xb0] sm:$0xf]
    %v1195 = vld [vmem:[#allocation7 + $0xb4] sm:$0xf]
    %v1196 = vld [vmem:[#allocation7 + $0xb8] sm:$0xf]
    %v1197 = vld [vmem:[#allocation7 + $0xbc] sm:$0xf]
    %v1198 = vld [vmem:[#allocation7 + $0xc0] sm:$0xf]
    %v1199 = vld [vmem:[#allocation7 + $0xc4] sm:$0xf]
    %v1200 = vld [vmem:[#allocation7 + $0xc8] sm:$0xf]
    %v1201 = vld [vmem:[#allocation7 + $0xcc] sm:$0xf]
    %v1202 = vld [vmem:[#allocation7 + $0xd0] sm:$0xf]
    %v1203 = vld [vmem:[#allocation7 + $0xd4] sm:$0xf]
    %v1204 = vld [vmem:[#allocation7 + $0xd8] sm:$0xf]
    %v1205 = vld [vmem:[#allocation7 + $0xdc] sm:$0xf]
    %v1206 = vld [vmem:[#allocation7 + $0xe0] sm:$0xf]
    %v1207 = vld [vmem:[#allocation7 + $0xe4] sm:$0xf]
    %v1208 = vld [vmem:[#allocation7 + $0xe8] sm:$0xf]
    %v1209 = vld [vmem:[#allocation7 + $0xec] sm:$0xf]
    %v1210 = vld [vmem:[#allocation7 + $0xf0] sm:$0xf]
    %v1211 = vld [vmem:[#allocation7 + $0xf4] sm:$0xf]
    %v1212 = vld [vmem:[#allocation7 + $0xf8] sm:$0xf]
    %v1213 = vld [vmem:[#allocation7 + $0xfc] sm:$0xf]
    %v1214 = vld [vmem:[%s8] sm:$0x1]
    %v1216 = vlaneseq
    %v1217 = vshrl.u32 %v1216, 7
    %v1218 = vsub.s32 0, %v1217
    %v1219 = vrot.slane %v1214, %v1218
    %v1285 = vunpack.c.l.b16 %v1150
    %v1286 = vunpack.c.l.b16 %v1151
    %v1287 = vunpack.c.l.b16 %v1152
    %v1288 = vunpack.c.l.b16 %v1153
    %v1289 = vunpack.c.l.b16 %v1154
    %v1290 = vunpack.c.l.b16 %v1155
    %v1291 = vunpack.c.l.b16 %v1156
    %v1292 = vunpack.c.l.b16 %v1157
    %v1293 = vunpack.c.l.b16 %v1158
    %v1294 = vunpack.c.l.b16 %v1159
    %v1295 = vunpack.c.l.b16 %v1160
    %v1296 = vunpack.c.l.b16 %v1161
    %v1297 = vunpack.c.l.b16 %v1162
    %v1298 = vunpack.c.l.b16 %v1163
    %v1299 = vunpack.c.l.b16 %v1164
    %v1300 = vunpack.c.l.b16 %v1165
    %v1301 = vunpack.c.l.b16 %v1166
    %v1302 = vunpack.c.l.b16 %v1167
    %v1303 = vunpack.c.l.b16 %v1168
    %v1304 = vunpack.c.l.b16 %v1169
    %v1305 = vunpack.c.l.b16 %v1170
    %v1306 = vunpack.c.l.b16 %v1171
    %v1307 = vunpack.c.l.b16 %v1172
    %v1308 = vunpack.c.l.b16 %v1173
    %v1309 = vunpack.c.l.b16 %v1174
    %v1310 = vunpack.c.l.b16 %v1175
    %v1311 = vunpack.c.l.b16 %v1176
    %v1312 = vunpack.c.l.b16 %v1177
    %v1313 = vunpack.c.l.b16 %v1178
    %v1314 = vunpack.c.l.b16 %v1179
    %v1315 = vunpack.c.l.b16 %v1180
    %v1316 = vunpack.c.l.b16 %v1181
    %v1317 = vunpack.c.l.b16 %v1182
    %v1318 = vunpack.c.l.b16 %v1183
    %v1319 = vunpack.c.l.b16 %v1184
    %v1320 = vunpack.c.l.b16 %v1185
    %v1321 = vunpack.c.l.b16 %v1186
    %v1322 = vunpack.c.l.b16 %v1187
    %v1323 = vunpack.c.l.b16 %v1188
    %v1324 = vunpack.c.l.b16 %v1189
    %v1325 = vunpack.c.l.b16 %v1190
    %v1326 = vunpack.c.l.b16 %v1191
    %v1327 = vunpack.c.l.b16 %v1192
    %v1328 = vunpack.c.l.b16 %v1193
    %v1329 = vunpack.c.l.b16 %v1194
    %v1330 = vunpack.c.l.b16 %v1195
    %v1331 = vunpack.c.l.b16 %v1196
    %v1332 = vunpack.c.l.b16 %v1197
    %v1333 = vunpack.c.l.b16 %v1198
    %v1334 = vunpack.c.l.b16 %v1199
    %v1335 = vunpack.c.l.b16 %v1200
    %v1336 = vunpack.c.l.b16 %v1201
    %v1337 = vunpack.c.l.b16 %v1202
    %v1338 = vunpack.c.l.b16 %v1203
    %v1339 = vunpack.c.l.b16 %v1204
    %v1340 = vunpack.c.l.b16 %v1205
    %v1341 = vunpack.c.l.b16 %v1206
    %v1342 = vunpack.c.l.b16 %v1207
    %v1343 = vunpack.c.l.b16 %v1208
    %v1344 = vunpack.c.l.b16 %v1209
    %v1345 = vunpack.c.l.b16 %v1210
    %v1346 = vunpack.c.l.b16 %v1211
    %v1347 = vunpack.c.l.b16 %v1212
    %v1348 = vunpack.c.l.b16 %v1213
    %v1349 = vpack.c.b16 %v1286, %v1285
    %v1350 = vpack.c.b16 %v1288, %v1287
    %v1351 = vpack.c.b16 %v1290, %v1289
    %v1352 = vpack.c.b16 %v1292, %v1291
    %v1353 = vpack.c.b16 %v1294, %v1293
    %v1354 = vpack.c.b16 %v1296, %v1295
    %v1355 = vpack.c.b16 %v1298, %v1297
    %v1356 = vpack.c.b16 %v1300, %v1299
    %v1357 = vpack.c.b16 %v1302, %v1301
    %v1358 = vpack.c.b16 %v1304, %v1303
    %v1359 = vpack.c.b16 %v1306, %v1305
    %v1360 = vpack.c.b16 %v1308, %v1307
    %v1361 = vpack.c.b16 %v1310, %v1309
    %v1362 = vpack.c.b16 %v1312, %v1311
    %v1363 = vpack.c.b16 %v1314, %v1313
    %v1364 = vpack.c.b16 %v1316, %v1315
    %v1365 = vpack.c.b16 %v1318, %v1317
    %v1366 = vpack.c.b16 %v1320, %v1319
    %v1367 = vpack.c.b16 %v1322, %v1321
    %v1368 = vpack.c.b16 %v1324, %v1323
    %v1369 = vpack.c.b16 %v1326, %v1325
    %v1370 = vpack.c.b16 %v1328, %v1327
    %v1371 = vpack.c.b16 %v1330, %v1329
    %v1372 = vpack.c.b16 %v1332, %v1331
    %v1373 = vpack.c.b16 %v1334, %v1333
    %v1374 = vpack.c.b16 %v1336, %v1335
    %v1375 = vpack.c.b16 %v1338, %v1337
    %v1376 = vpack.c.b16 %v1340, %v1339
    %v1377 = vpack.c.b16 %v1342, %v1341
    %v1378 = vpack.c.b16 %v1344, %v1343
    %v1379 = vpack.c.b16 %v1346, %v1345
    %v1380 = vpack.c.b16 %v1348, %v1347
    %1413 = vmatprep.subr.bf16.mxu0 0
    %1414 = vmatpush1.bf16.msra.mxu0 %v1356
    %1415 = vmatprep.subr.bf16.mxu0 0
    %1416 = vmatpush1.bf16.msra.mxu0 %v1355
    %1417 = vmatprep.subr.bf16.mxu0 0
    %1418 = vmatpush1.bf16.msra.mxu0 %v1354
    %1419 = vmatprep.subr.bf16.mxu0 0
    %1420 = vmatpush1.bf16.msra.mxu0 %v1353
    %1421 = vmatprep.subr.bf16.mxu0 0
    %1422 = vmatpush1.bf16.msra.mxu0 %v1352
    %1423 = vmatprep.subr.bf16.mxu0 0
    %1424 = vmatpush1.bf16.msra.mxu0 %v1351
    %1425 = vmatprep.subr.bf16.mxu0 0
    %1426 = vmatpush1.bf16.msra.mxu0 %v1350
    %1427 = vmatprep.subr.bf16.mxu0 0
    %1428 = vmatpush1.bf16.msra.mxu0 %v1349
    %1429 = vmatprep.subr.bf16.mxu0 0
    %1430 = vmatpush2.bf16.msra.mxu0 %v1364
    %1431 = vmatprep.subr.bf16.mxu0 0
    %1432 = vmatpush2.bf16.msra.mxu0 %v1363
    %1433 = vmatprep.subr.bf16.mxu0 0
    %1434 = vmatpush2.bf16.msra.mxu0 %v1362
    %1435 = vmatprep.subr.bf16.mxu0 0
    %1436 = vmatpush2.bf16.msra.mxu0 %v1361
    %1437 = vmatprep.subr.bf16.mxu0 0
    %1438 = vmatpush2.bf16.msra.mxu0 %v1360
    %1439 = vmatprep.subr.bf16.mxu0 0
    %1440 = vmatpush2.bf16.msra.mxu0 %v1359
    %1441 = vmatprep.subr.bf16.mxu0 0
    %1442 = vmatpush2.bf16.msra.mxu0 %v1358
    %1443 = vmatprep.subr.bf16.mxu0 0
    %1444 = vmatpush2.bf16.msra.mxu0 %v1357
    %1445 = vmatprep.mubr.bf16.mxu0 %v1135
    %1446 = vmatmul.mubr.bf16.gmra.mxu0 %v1134
    %v1447 = vpop.f32.mrf.mxu0
    %v1448 = vadd.f32 %v1219, %v1447
    %v1449 = vpop.f32.mrf.mxu0
    %v1450 = vpop.f32.mrf.mxu0
    %v1451 = vadd.f32 %v1219, %v1450
    %v1452 = vpop.f32.mrf.mxu0
    %1453 = vmatprep.mubr.bf16.mxu0 %v1139
    %1454 = vmatmul.mubr.bf16.gmra.mxu0 %v1138
    %v1455 = vpop.f32.mrf.mxu0
    %v1456 = vadd.f32 %v1219, %v1455
    %v1457 = vpop.f32.mrf.mxu0
    %v1458 = vpop.f32.mrf.mxu0
    %v1459 = vadd.f32 %v1219, %v1458
    %v1460 = vpop.f32.mrf.mxu0
    %1461 = vmatprep.mubr.bf16.mxu0 %v1143
    %1462 = vmatmul.mubr.bf16.gmra.mxu0 %v1142
    %v1463 = vpop.f32.mrf.mxu0
    %v1464 = vadd.f32 %v1219, %v1463
    %v1465 = vpop.f32.mrf.mxu0
    %v1466 = vpop.f32.mrf.mxu0
    %v1467 = vadd.f32 %v1219, %v1466
    %v1468 = vpop.f32.mrf.mxu0
    %1469 = vmatprep.mubr.bf16.mxu0 %v1147
    %1470 = vmatmul.mubr.bf16.gmra.mxu0 %v1146
    %v1471 = vpop.f32.mrf.mxu0
    %v1472 = vadd.f32 %v1219, %v1471
    %v1473 = vpop.f32.mrf.mxu0
    %v1474 = vpop.f32.mrf.mxu0
    %v1475 = vadd.f32 %v1219, %v1474
    %v1476 = vpop.f32.mrf.mxu0
    %1477 = vdwg.mxu0
    %1478 = vmatprep.subr.bf16.mxu0 0
    %1479 = vmatpush1.bf16.msra.mxu0 %v1372
    %1480 = vmatprep.subr.bf16.mxu0 0
    %1481 = vmatpush1.bf16.msra.mxu0 %v1371
    %1482 = vmatprep.subr.bf16.mxu0 0
    %1483 = vmatpush1.bf16.msra.mxu0 %v1370
    %1484 = vmatprep.subr.bf16.mxu0 0
    %1485 = vmatpush1.bf16.msra.mxu0 %v1369
    %1486 = vmatprep.subr.bf16.mxu0 0
    %1487 = vmatpush1.bf16.msra.mxu0 %v1368
    %1488 = vmatprep.subr.bf16.mxu0 0
    %1489 = vmatpush1.bf16.msra.mxu0 %v1367
    %1490 = vmatprep.subr.bf16.mxu0 0
    %1491 = vmatpush1.bf16.msra.mxu0 %v1366
    %1492 = vmatprep.subr.bf16.mxu0 0
    %1493 = vmatpush1.bf16.msra.mxu0 %v1365
    %1494 = vmatprep.subr.bf16.mxu0 0
    %1495 = vmatpush2.bf16.msra.mxu0 %v1380
    %1496 = vmatprep.subr.bf16.mxu0 0
    %1497 = vmatpush2.bf16.msra.mxu0 %v1379
    %1498 = vmatprep.subr.bf16.mxu0 0
    %1499 = vmatpush2.bf16.msra.mxu0 %v1378
    %1500 = vmatprep.subr.bf16.mxu0 0
    %1501 = vmatpush2.bf16.msra.mxu0 %v1377
    %1502 = vmatprep.subr.bf16.mxu0 0
    %1503 = vmatpush2.bf16.msra.mxu0 %v1376
    %1504 = vmatprep.subr.bf16.mxu0 0
    %1505 = vmatpush2.bf16.msra.mxu0 %v1375
    %1506 = vmatprep.subr.bf16.mxu0 0
    %1507 = vmatpush2.bf16.msra.mxu0 %v1374
    %1508 = vmatprep.subr.bf16.mxu0 0
    %1509 = vmatpush2.bf16.msra.mxu0 %v1373
    %1510 = vmatprep.mubr.bf16.mxu0 %v1137
    %1511 = vmatmul.mubr.bf16.gmra.mxu0 %v1136
    %v1512 = vpop.f32.mrf.mxu0
    %v1513 = vadd.f32 %v1448, %v1512
    %v1514 = vpop.f32.mrf.mxu0
    %v1515 = vpop.f32.mrf.mxu0
    %v1516 = vadd.f32 %v1451, %v1515
    %v1517 = vpop.f32.mrf.mxu0
    %1518 = vmatprep.mubr.bf16.mxu0 %v1141
    %1519 = vmatmul.mubr.bf16.gmra.mxu0 %v1140
    %v1520 = vpop.f32.mrf.mxu0
    %v1521 = vadd.f32 %v1456, %v1520
    %v1522 = vpop.f32.mrf.mxu0
    %v1523 = vpop.f32.mrf.mxu0
    %v1524 = vadd.f32 %v1459, %v1523
    %v1525 = vpop.f32.mrf.mxu0
    %1526 = vmatprep.mubr.bf16.mxu0 %v1145
    %1527 = vmatmul.mubr.bf16.gmra.mxu0 %v1144
    %v1528 = vpop.f32.mrf.mxu0
    %v1529 = vadd.f32 %v1464, %v1528
    %v1530 = vpop.f32.mrf.mxu0
    %v1531 = vpop.f32.mrf.mxu0
    %v1532 = vadd.f32 %v1467, %v1531
    %v1533 = vpop.f32.mrf.mxu0
    %1534 = vmatprep.mubr.bf16.mxu0 %v1149
    %1535 = vmatmul.mubr.bf16.gmra.mxu0 %v1148
    %v1536 = vpop.f32.mrf.mxu0
    %v1537 = vadd.f32 %v1472, %v1536
    %v1538 = vpop.f32.mrf.mxu0
    %v1539 = vpop.f32.mrf.mxu0
    %v1540 = vadd.f32 %v1475, %v1539
    %v1541 = vpop.f32.mrf.mxu0
    %1542 = vdwg.mxu0
    %v1543 = vsub.f32 0.0, %v1513
    %v1544 = vsub.f32 0.0, %v1516
    %v1545 = vsub.f32 0.0, %v1521
    %v1546 = vsub.f32 0.0, %v1524
    %v1547 = vsub.f32 0.0, %v1529
    %v1548 = vsub.f32 0.0, %v1532
    %v1549 = vsub.f32 0.0, %v1537
    %v1550 = vsub.f32 0.0, %v1540
    %v1551 = vmul.f32 %v1543, 1.442695
    %v1552 = vpow.pop %v1551
    %v1553 = vmul.f32 %v1544, 1.442695
    %v1554 = vpow.pop %v1553
    %v1555 = vmul.f32 %v1545, 1.442695
    %v1556 = vpow.pop %v1555
    %v1557 = vmul.f32 %v1546, 1.442695
    %v1558 = vpow.pop %v1557
    %v1559 = vmul.f32 %v1547, 1.442695
    %v1560 = vpow.pop %v1559
    %v1561 = vmul.f32 %v1548, 1.442695
    %v1562 = vpow.pop %v1561
    %v1563 = vmul.f32 %v1549, 1.442695
    %v1564 = vpow.pop %v1563
    %v1565 = vmul.f32 %v1550, 1.442695
    %v1566 = vpow.pop %v1565
    %v1567 = vadd.f32 %v1552, 1.0
    %v1568 = vadd.f32 %v1554, 1.0
    %v1569 = vadd.f32 %v1556, 1.0
    %v1570 = vadd.f32 %v1558, 1.0
    %v1571 = vadd.f32 %v1560, 1.0
    %v1572 = vadd.f32 %v1562, 1.0
    %v1573 = vadd.f32 %v1564, 1.0
    %v1574 = vadd.f32 %v1566, 1.0
    %v1575 = vrcp.pop %v1567
    %v1576 = vrcp.pop %v1568
    %v1577 = vrcp.pop %v1569
    %v1578 = vrcp.pop %v1570
    %v1579 = vrcp.pop %v1571
    %v1580 = vrcp.pop %v1572
    %v1581 = vrcp.pop %v1573
    %v1582 = vrcp.pop %v1574
    %v1583 = vlaneseq
    %v1584 = vand.u32 %v1583, 127
    %vm1585 = vcmp.lt.s32.totalorder %v1584, 8
    %v1586 = vmax.f32 %v1513, 0.0
    %v1587 = vmax.f32 %v1516, 0.0
    %v1588 = vmax.f32 %v1521, 0.0
    %v1589 = vmax.f32 %v1524, 0.0
    %v1590 = vmax.f32 %v1529, 0.0
    %v1591 = vmax.f32 %v1532, 0.0
    %v1592 = vmax.f32 %v1537, 0.0
    %v1593 = vmax.f32 %v1540, 0.0
    %v1594 = vsel %vm1585, %v1575, %v1586
    %v1595 = vsel %vm1585, %v1576, %v1587
    %v1596 = vsel %vm1585, %v1577, %v1588
    %v1597 = vsel %vm1585, %v1578, %v1589
    %v1598 = vsel %vm1585, %v1579, %v1590
    %v1599 = vsel %vm1585, %v1580, %v1591
    %v1600 = vsel %vm1585, %v1581, %v1592
    %v1601 = vsel %vm1585, %v1582, %v1593
    %v1602 = vpack.c.bf16 %v1595, %v1594
    %v1603 = vpack.c.bf16 %v1597, %v1596
    %v1604 = vpack.c.bf16 %v1599, %v1598
    %v1605 = vpack.c.bf16 %v1601, %v1600
    %v1610 = vunpack.c.l.b16 %v1602
    %v1611 = vunpack.c.h.b16 %v1602
    %v1612 = vunpack.c.l.b16 %v1603
    %v1613 = vunpack.c.h.b16 %v1603
    %v1614 = vunpack.c.l.b16 %v1604
    %v1615 = vunpack.c.h.b16 %v1604
    %v1616 = vunpack.c.l.b16 %v1605
    %v1617 = vunpack.c.h.b16 %v1605
    %v1618 = vpack.c.b16 %v1610, %v1610
    %v1619 = vpack.c.b16 %v1611, %v1611
    %v1620 = vpack.c.b16 %v1612, %v1612
    %v1621 = vpack.c.b16 %v1613, %v1613
    %v1622 = vpack.c.b16 %v1614, %v1614
    %v1623 = vpack.c.b16 %v1615, %v1615
    %v1624 = vpack.c.b16 %v1616, %v1616
    %v1625 = vpack.c.b16 %v1617, %v1617
    %1634 = vst [vmem:[#allocation8] sm:$0xf] %v1618
    %1635 = vst [vmem:[#allocation8 + $0x4] sm:$0xf] %v1619
    %1636 = vst [vmem:[#allocation8 + $0x8] sm:$0xf] %v1620
    %1637 = vst [vmem:[#allocation8 + $0xc] sm:$0xf] %v1621
    %1638 = vst [vmem:[#allocation8 + $0x10] sm:$0xf] %v1622
    %1639 = vst [vmem:[#allocation8 + $0x14] sm:$0xf] %v1623
    %1640 = vst [vmem:[#allocation8 + $0x18] sm:$0xf] %v1624
    %1641 = vst [vmem:[#allocation8 + $0x1c] sm:$0xf] %v1625
    // Predicated region
    $region50: #{tpu_custom_call.1} parent=1 // pred_check
      _
    $region51: #{tpu_custom_call.1} parent=1 // pred_check_branch
      %1643 = sbr.rel (0) target = $region53
    $region52: #{tpu_custom_call.1} parent=1 // pred_region
      %s1645 = ssub.s32 512, 512
      %1646 = vsyncadd [#allocation4], %s1645
      %s1647 = sshll.u32 [#allocation8], 4
      %s1648 = int_to_ptr.vmem [resolvable:$true] %s1647
      %1653 = dma.vmem_to_hbm [thread:$0]  %s1648, 512, %s9, [#allocation4], 64, 64, 4
    $region53: #{tpu_custom_call.1} parent=1 // pred_fallthru
      _
    // Predicated region
    $region54: #{tpu_custom_call.1} parent=1 // pred_check
      _
    $region55: #{tpu_custom_call.1} parent=1 // pred_check_branch
      %1655 = sbr.rel (0) target = $region57
    $region56: #{tpu_custom_call.1} parent=1 // pred_region
      %1656 = dma.done [#allocation4], 512
    $region57: #{tpu_custom_call.1} parent=1 // pred_fallthru
      _
    %1657 = vsyncpa [#allocation3], 1
    %1658 = vsyncpa [#allocation6], 1
    %1659 = vsyncpa [#allocation4], 1

</llo_original>
